<compile_context>
chip_gen: v7x
topology: tpu7x:2x2x1
jax: 0.10.0
libtpu: 0.0.40
codegen_flags: <defaults>
</compile_context>

<pallas_src>
import math

import jax
import jax.numpy as jnp
from jax.experimental import pallas as pl
from jax.experimental.pallas import tpu as pltpu

BN_EPS = 1e-5
LANE = 128


def _round_up(v, m):
    return ((v + m - 1) // m) * m


def _vmem_limit_bytes():
    """Generation-aware per-kernel VMEM budget (v7x only has 64 MiB physical per TC)."""
    phys = None
    try:
        phys = getattr(pltpu.get_tpu_info(), "vmem_capacity_bytes", None)
    except Exception:
        phys = None
    if phys is None:
        return 48 * 1024 * 1024            # safe on every generation
    if phys <= 64 * 1024 * 1024:           # v7x
        return 48 * 1024 * 1024
    return 96 * 1024 * 1024                # v5e / v6e (128 MiB physical)


# ------------------- Pass 1 (reassociated): h1 = A @ (X @ W1^T) + stats -------------------
def _p1_agg_kernel(a_ref, xw_ref, h1_ref, s_ref, sq_ref, acc_ref):
    k = pl.program_id(1)

    @pl.when(k == 0)
    def _():
        acc_ref[...] = jnp.zeros_like(acc_ref)

    acc_ref[...] += jnp.dot(a_ref[...], xw_ref[...], preferred_element_type=jnp.float32)

    @pl.when(k == pl.num_programs(1) - 1)
    def _():
        h1_bf = acc_ref[...].astype(jnp.bfloat16)
        h1_ref[...] = h1_bf
        h1f = h1_bf.astype(jnp.float32)            # stats from the rounded values
        s_ref[...] = jnp.sum(h1f, axis=0, keepdims=True)
        sq_ref[...] = jnp.sum(h1f * h1f, axis=0, keepdims=True)


# --------------------- Pass 1 (fused): h1 = (A @ X) @ W1^T + stats ------------------------
def _p1_agg_linear1_kernel(a_ref, x_ref, w1_ref, h1_ref, s_ref, sq_ref, acc_ref):
    k = pl.program_id(1)

    @pl.when(k == 0)
    def _():
        acc_ref[...] = jnp.zeros_like(acc_ref)

    acc_ref[...] += jnp.dot(a_ref[...], x_ref[...], preferred_element_type=jnp.float32)

    @pl.when(k == pl.num_programs(1) - 1)
    def _():
        h = acc_ref[...].astype(jnp.bfloat16)
        h1 = jnp.dot(h, w1_ref[...], preferred_element_type=jnp.float32)
        h1_bf = h1.astype(jnp.bfloat16)
        h1_ref[...] = h1_bf
        h1f = h1_bf.astype(jnp.float32)
        s_ref[...] = jnp.sum(h1f, axis=0, keepdims=True)
        sq_ref[...] = jnp.sum(h1f * h1f, axis=0, keepdims=True)


# ------------------------- Pass 2: BN1 + ReLU + Linear2 (+ stats) -------------------------
def _make_p2_kernel(tm, n_true, has_pad):
    def _emit(h1, w2, h2_ref, s_ref, sq_ref):
        h2 = jnp.dot(h1.astype(jnp.bfloat16), w2, preferred_element_type=jnp.float32)
        h2_bf = h2.astype(jnp.bfloat16)
        h2_ref[...] = h2_bf
        h2f = h2_bf.astype(jnp.float32)            # stats from the rounded values
        s_ref[...] = jnp.sum(h2f, axis=0, keepdims=True)
        sq_ref[...] = jnp.sum(h2f * h2f, axis=0, keepdims=True)

    def _p2_kernel(h1_ref, scale_ref, shift_ref, w2_ref, h2_ref, s_ref, sq_ref):
        i = pl.program_id(0)
        h1 = jnp.maximum(
            h1_ref[...].astype(jnp.float32) * scale_ref[...] + shift_ref[...], 0.0)
        w2 = w2_ref[...]

        if has_pad:
            last = pl.num_programs(0) - 1

            @pl.when(i < last)
            def _():
                _emit(h1, w2, h2_ref, s_ref, sq_ref)

            @pl.when(i == last)  # padded rows only live in the last row tile
            def _():
                rows = i * tm + jax.lax.broadcasted_iota(jnp.int32, h1.shape, 0)
                _emit(jnp.where(rows < n_true, h1, 0.0), w2, h2_ref, s_ref, sq_ref)
        else:
            _emit(h1, w2, h2_ref, s_ref, sq_ref)

    return _p2_kernel


# ------------------------------------ Pass 3: BN2 + ReLU ----------------------------------
def _p3_bn_relu_kernel(h2_ref, scale_ref, shift_ref, out_ref):
    out_ref[...] = jnp.maximum(
        h2_ref[...].astype(jnp.float32) * scale_ref[...] + shift_ref[...], 0.0)


def _bn_affine(s, sq, n_true, gamma, beta):
    """Combine per-row-tile (sum, sumsq) into BN scale/shift (training-mode batch stats)."""
    total_s = jnp.sum(s, axis=0)
    total_sq = jnp.sum(sq, axis=0)
    mean = total_s / n_true
    var = jnp.maximum(total_sq / n_true - mean * mean, 0.0)   # biased var (PyTorch BN fwd)
    scale = gamma * jax.lax.rsqrt(var + BN_EPS)
    shift = beta - mean * scale
    return scale.reshape(1, -1), shift.reshape(1, -1)


def gin_edge_aggregator(x, edge_index, edge_weight, params, *, tile=1024):
    """x: [N, C_in] f32, edge_index: [2, E] i32, edge_weight: [E] f32 or None."""
    n, c_in = x.shape
    hidden = params["w1"].shape[0]

    if edge_weight is None:
        edge_weight = jnp.ones((edge_index.shape[1],), jnp.float32)

    cp = _round_up(c_in, LANE)
    hp = _round_up(hidden, LANE)
    # Square tiles (tm == tk); clamp for small graphs so padding is only to the tile size.
    t = min(tile, _round_up(max(n, 1), 256))
    np_ = _round_up(max(n, 1), t)
    n_row_tiles = np_ // t
    n_k_tiles = np_ // t
    has_pad = np_ > n
    vmem_limit = _vmem_limit_bytes()

    # ---- Glue: dense adjacency A[dst, src] += w, (1+eps)*x folded onto the diagonal.
    # Scatter into the tight (n, n) buffer, then pad + cast to bf16 once.
    # TODO(synk): stock PyG GINConv ignores edge_weight in its message fn; we honor it as a
    # per-edge scalar on the summed neighbor features (the more general semantics).
    src, dst = edge_index[0], edge_index[1]
    adj_small = jnp.zeros((n, n), jnp.float32).at[dst, src].add(
        edge_weight.astype(jnp.float32))
    diag = jnp.arange(n)
    adj_small = adj_small.at[diag, diag].add(
        1.0 + jnp.asarray(params["gin_eps"], jnp.float32))
    adj = jnp.zeros((np_, np_), jnp.bfloat16).at[:n, :n].set(adj_small.astype(jnp.bfloat16))

    xp = jnp.zeros((np_, cp), jnp.bfloat16).at[:n, :c_in].set(x.astype(jnp.bfloat16))

    # Pre-transposed, zero-padded weights (biases dropped: cancelled by training-mode BN).
    w1_t = jnp.zeros((cp, hp), jnp.bfloat16).at[:c_in, :hidden].set(
        params["w1"].T.astype(jnp.bfloat16))
    w2_t = jnp.zeros((hp, hp), jnp.bfloat16).at[:hidden, :hidden].set(
        params["w2"].T.astype(jnp.bfloat16))
    g1 = jnp.zeros((hp,), jnp.float32).at[:hidden].set(params["bn1_gamma"])
    be1 = jnp.zeros((hp,), jnp.float32).at[:hidden].set(params["bn1_beta"])
    g2 = jnp.zeros((hp,), jnp.float32).at[:hidden].set(params["bn2_gamma"])
    be2 = jnp.zeros((hp,), jnp.float32).at[:hidden].set(params["bn2_beta"])

    # ---------------------------- Pass 1: aggregation (+ Linear1) -------------------------
    reassociate = hp <= cp  # A@(X@W1) is byte-neutral or better; skip if it inflates K bytes
    stats_shape = jax.ShapeDtypeStruct((n_row_tiles, hp), jnp.float32)

    if reassociate:
        xw1 = jnp.dot(xp, w1_t, preferred_element_type=jnp.float32).astype(jnp.bfloat16)
        h1_pre, s1, sq1 = pl.pallas_call(
            _p1_agg_kernel,
            out_shape=(jax.ShapeDtypeStruct((np_, hp), jnp.bfloat16), stats_shape, stats_shape),
            grid_spec=pltpu.PrefetchScalarGridSpec(
                num_scalar_prefetch=0,
                grid=(n_row_tiles, n_k_tiles),
                in_specs=[
                    pl.BlockSpec((t, t), lambda i, k: (i, k)),      # A tile
                    pl.BlockSpec((t, hp), lambda i, k: (k, 0)),     # XW1 tile
                ],
                out_specs=[
                    pl.BlockSpec((t, hp), lambda i, k: (i, 0)),
                    pl.BlockSpec((1, hp), lambda i, k: (i, 0)),
                    pl.BlockSpec((1, hp), lambda i, k: (i, 0)),
                ],
                scratch_shapes=[pltpu.VMEM((t, hp), jnp.float32)],
            ),
            compiler_params=pltpu.CompilerParams(
                dimension_semantics=("parallel", "arbitrary"),
                vmem_limit_bytes=vmem_limit),
            cost_estimate=pl.CostEstimate(
                flops=2 * np_ * np_ * hp,
                transcendentals=0,
                bytes_accessed=2 * np_ * np_ + 2 * np_ * hp * n_row_tiles
                               + 2 * np_ * hp + 8 * n_row_tiles * hp),
        )(adj, xw1)
    else:
        h1_pre, s1, sq1 = pl.pallas_call(
            _p1_agg_linear1_kernel,
            out_shape=(jax.ShapeDtypeStruct((np_, hp), jnp.bfloat16), stats_shape, stats_shape),
            grid_spec=pltpu.PrefetchScalarGridSpec(
                num_scalar_prefetch=0,
                grid=(n_row_tiles, n_k_tiles),
                in_specs=[
                    pl.BlockSpec((t, t), lambda i, k: (i, k)),      # A tile
                    pl.BlockSpec((t, cp), lambda i, k: (k, 0)),     # X tile
                    pl.BlockSpec((cp, hp), lambda i, k: (0, 0)),    # W1^T (resident)
                ],
                out_specs=[
                    pl.BlockSpec((t, hp), lambda i, k: (i, 0)),
                    pl.BlockSpec((1, hp), lambda i, k: (i, 0)),
                    pl.BlockSpec((1, hp), lambda i, k: (i, 0)),
                ],
                scratch_shapes=[pltpu.VMEM((t, cp), jnp.float32)],
            ),
            compiler_params=pltpu.CompilerParams(
                dimension_semantics=("parallel", "arbitrary"),
                vmem_limit_bytes=vmem_limit),
            cost_estimate=pl.CostEstimate(
                flops=2 * np_ * np_ * cp + 2 * np_ * cp * hp,
                transcendentals=0,
                bytes_accessed=2 * np_ * np_ + 2 * np_ * cp * n_row_tiles
                               + 2 * cp * hp + 2 * np_ * hp + 8 * n_row_tiles * hp),
        )(adj, xp, w1_t)

    scale1, shift1 = _bn_affine(s1, sq1, n, g1, be1)

    # ------------------------- Pass 2: BN1 + ReLU + Linear2 + stats ------------------------
    h2_pre, s2, sq2 = pl.pallas_call(
        _make_p2_kernel(t, n, has_pad),
        out_shape=(jax.ShapeDtypeStruct((np_, hp), jnp.bfloat16), stats_shape, stats_shape),
        grid_spec=pltpu.PrefetchScalarGridSpec(
            num_scalar_prefetch=0,
            grid=(n_row_tiles,),
            in_specs=[
                pl.BlockSpec((t, hp), lambda i: (i, 0)),        # h1_pre tile (bf16)
                pl.BlockSpec((1, hp), lambda i: (0, 0)),        # scale1
                pl.BlockSpec((1, hp), lambda i: (0, 0)),        # shift1
                pl.BlockSpec((hp, hp), lambda i: (0, 0)),       # W2^T (resident)
            ],
            out_specs=[
                pl.BlockSpec((t, hp), lambda i: (i, 0)),
                pl.BlockSpec((1, hp), lambda i: (i, 0)),
                pl.BlockSpec((1, hp), lambda i: (i, 0)),
            ],
        ),
        compiler_params=pltpu.CompilerParams(
            dimension_semantics=("parallel",),
            vmem_limit_bytes=vmem_limit),
        cost_estimate=pl.CostEstimate(
            flops=2 * np_ * hp * hp,
            transcendentals=0,
            bytes_accessed=4 * np_ * hp + 2 * hp * hp + 16 * n_row_tiles * hp),
    )(h1_pre, scale1, shift1, w2_t)

    scale2, shift2 = _bn_affine(s2, sq2, n, g2, be2)

    # --------------------------------- Pass 3: BN2 + ReLU ---------------------------------
    out_full = pl.pallas_call(
        _p3_bn_relu_kernel,
        out_shape=jax.ShapeDtypeStruct((np_, hp), jnp.float32),
        grid_spec=pltpu.PrefetchScalarGridSpec(
            num_scalar_prefetch=0,
            grid=(n_row_tiles,),
            in_specs=[
                pl.BlockSpec((t, hp), lambda i: (i, 0)),        # h2_pre tile (bf16)
                pl.BlockSpec((1, hp), lambda i: (0, 0)),
                pl.BlockSpec((1, hp), lambda i: (0, 0)),
            ],
            out_specs=pl.BlockSpec((t, hp), lambda i: (i, 0)),
        ),
        compiler_params=pltpu.CompilerParams(
            dimension_semantics=("parallel",),
            vmem_limit_bytes=vmem_limit),
        cost_estimate=pl.CostEstimate(
            flops=2 * np_ * hp,
            transcendentals=0,
            bytes_accessed=6 * np_ * hp),
    )(h2_pre, scale2, shift2)

    return out_full[:n, :hidden]


# ---------------------------------- Pure-JAX reference ----------------------------------
def reference_forward(x, edge_index, edge_weight, params):
    n = x.shape[0]
    if edge_weight is None:
        edge_weight = jnp.ones((edge_index.shape[1],), jnp.float32)
    adj = jnp.zeros((n, n), jnp.float32).at[edge_index[1], edge_index[0]].add(edge_weight)
    h = (1.0 + params["gin_eps"]) * x + adj @ x
    h1 = h @ params["w1"].T + params["b1"]
    mu = jnp.mean(h1, axis=0)
    var = jnp.mean((h1 - mu) ** 2, axis=0)
    h1 = (h1 - mu) * jax.lax.rsqrt(var + BN_EPS) * params["bn1_gamma"] + params["bn1_beta"]
    h1 = jnp.maximum(h1, 0.0)
    h2 = h1 @ params["w2"].T + params["b2"]
    mu = jnp.mean(h2, axis=0)
    var = jnp.mean((h2 - mu) ** 2, axis=0)
    h2 = (h2 - mu) * jax.lax.rsqrt(var + BN_EPS) * params["bn2_gamma"] + params["bn2_beta"]
    return jnp.maximum(h2, 0.0)


def init_params(key, in_channels, hidden_channels):
    k1, k2, k3, k4 = jax.random.split(key, 4)
    s1 = 1.0 / jnp.sqrt(in_channels)
    s2 = 1.0 / jnp.sqrt(hidden_channels)
    return {
        "gin_eps": 0.0,  # GINConv(train_eps=True) initializes eps to 0
        "w1": jax.random.uniform(k1, (hidden_channels, in_channels), jnp.float32, -s1, s1),
        "b1": jax.random.uniform(k2, (hidden_channels,), jnp.float32, -s1, s1),
        "bn1_gamma": jnp.ones((hidden_channels,), jnp.float32),
        "bn1_beta": jnp.zeros((hidden_channels,), jnp.float32),
        "w2": jax.random.uniform(k3, (hidden_channels, hidden_channels), jnp.float32, -s2, s2),
        "b2": jax.random.uniform(k4, (hidden_channels,), jnp.float32, -s2, s2),
        "bn2_gamma": jnp.ones((hidden_channels,), jnp.float32),
        "bn2_beta": jnp.zeros((hidden_channels,), jnp.float32),
    }


if __name__ == "__main__":
    key = jax.random.PRNGKey(0)
    kx, ke, kw, kp = jax.random.split(key, 4)

    N, C_IN, HIDDEN, E = 8, 16, 32, 16

    x = jax.random.normal(kx, (N, C_IN), jnp.float32)
    edge_index = jax.random.randint(ke, (2, E), 0, N, dtype=jnp.int32)
    edge_weight = jax.random.uniform(kw, (E,), jnp.float32)

    params = init_params(kp, C_IN, HIDDEN)

    fwd = jax.jit(gin_edge_aggregator)
    out = jax.block_until_ready(fwd(x, edge_index, edge_weight, params))

    ref = reference_forward(x, edge_index, edge_weight, params)

    assert out.shape == (N, HIDDEN)
    assert bool(jnp.all(jnp.isfinite(out)))
    max_err = float(jnp.max(jnp.abs(out - ref)))
    # bf16 MXU operands + bf16 intermediates -> loose tolerance vs the f32 reference.
    assert max_err < 0.2, f"max abs err vs reference: {max_err}"
    print("KERNEL_OK")
</pallas_src>

<mosaic_0001>
module attributes {stable_mosaic.version = 11 : i64} {
  func.func private @main(%arg0: i32) attributes {dimension_semantics = [#tpu.dimension_semantics<core_parallel>], iteration_bounds = array<i64: 2>, tpu.core_type = #tpu.core_type<sc_scalar_subcore>, window_params = []} {
    return
  }
}

module attributes {stable_mosaic.version = 11 : i64} {
  func.func private @main(%arg0: i32) attributes {dimension_semantics = [#tpu.dimension_semantics<core_parallel>], iteration_bounds = array<i64: 2>, tpu.core_type = #tpu.core_type<sc_scalar_subcore>, window_params = []} {
    return
  }
}

module attributes {stable_mosaic.version = 11 : i64} {
  func.func @_p3_bn_relu_kernel(%arg0: i32, %arg1: memref<256x128xbf16, #tpu.memory_space<vmem>>, %arg2: memref<1x128xf32, #tpu.memory_space<vmem>>, %arg3: memref<1x128xf32, #tpu.memory_space<vmem>>, %arg4: memref<256x128xf32, #tpu.memory_space<vmem>>) attributes {dimension_semantics = [#tpu.dimension_semantics<parallel>], iteration_bounds = array<i64: 1>, scalar_prefetch = 0 : i64, scratch_operands = 0 : i64, tpu.core_type = #tpu.core_type<tc>, window_params = [{transform_indices = @transform_0, window_bounds = array<i64: 256, 128>}, {pipeline_mode = #tpu.pipeline_mode<synchronous>, transform_indices = @transform_1, window_bounds = array<i64: 1, 128>}, {pipeline_mode = #tpu.pipeline_mode<synchronous>, transform_indices = @transform_2, window_bounds = array<i64: 1, 128>}, {transform_indices = @transform_3, window_bounds = array<i64: 256, 128>}]} {
    %c0 = arith.constant 0 : index
    %c0_0 = arith.constant 0 : index
    %0 = vector.load %arg1[%c0, %c0_0] : memref<256x128xbf16, #tpu.memory_space<vmem>>, vector<256x128xbf16>
    %1 = arith.extf %0 : vector<256x128xbf16> to vector<256x128xf32>
    %c0_1 = arith.constant 0 : index
    %c0_2 = arith.constant 0 : index
    %2 = vector.load %arg2[%c0_1, %c0_2] : memref<1x128xf32, #tpu.memory_space<vmem>>, vector<1x128xf32>
    %3 = vector.broadcast %2 : vector<1x128xf32> to vector<256x128xf32>
    %4 = arith.mulf %1, %3 : vector<256x128xf32>
    %c0_3 = arith.constant 0 : index
    %c0_4 = arith.constant 0 : index
    %5 = vector.load %arg3[%c0_3, %c0_4] : memref<1x128xf32, #tpu.memory_space<vmem>>, vector<1x128xf32>
    %6 = vector.broadcast %5 : vector<1x128xf32> to vector<256x128xf32>
    %7 = arith.addf %4, %6 : vector<256x128xf32>
    %cst = arith.constant 0.000000e+00 : f32
    %8 = vector.broadcast %cst : f32 to vector<256x128xf32>
    %9 = arith.maximumf %7, %8 : vector<256x128xf32>
    %c0_5 = arith.constant 0 : index
    %c0_6 = arith.constant 0 : index
    %10 = vector.load %arg4[%c0_5, %c0_6] : memref<256x128xf32, #tpu.memory_space<vmem>>, vector<256x128xf32>
    tpu.vector_store %arg4[%c0_5, %c0_6], %9 {strides = array<i32>} : memref<256x128xf32, #tpu.memory_space<vmem>>, vector<256x128xf32>,
    return
  }
  func.func @transform_0(%arg0: i32) -> (i32, i32) {
    %c0_i32 = arith.constant 0 : i32
    %c0_i32_0 = arith.constant 0 : i32
    return %arg0, %c0_i32 : i32, i32
  }
  func.func @transform_1(%arg0: i32) -> (i32, i32) {
    %c0_i32 = arith.constant 0 : i32
    %c0_i32_0 = arith.constant 0 : i32
    %c0_i32_1 = arith.constant 0 : i32
    return %c0_i32, %c0_i32_0 : i32, i32
  }
  func.func @transform_2(%arg0: i32) -> (i32, i32) {
    %c0_i32 = arith.constant 0 : i32
    %c0_i32_0 = arith.constant 0 : i32
    %c0_i32_1 = arith.constant 0 : i32
    return %c0_i32, %c0_i32_0 : i32, i32
  }
  func.func @transform_3(%arg0: i32) -> (i32, i32) {
    %c0_i32 = arith.constant 0 : i32
    %c0_i32_0 = arith.constant 0 : i32
    return %arg0, %c0_i32 : i32, i32
  }
}

module attributes {stable_mosaic.version = 11 : i64} {
  func.func @_p1_agg_kernel(%arg0: i32, %arg1: i32, %arg2: memref<256x256xbf16, #tpu.memory_space<vmem>>, %arg3: memref<256x128xbf16, #tpu.memory_space<vmem>>, %arg4: memref<256x128xbf16, #tpu.memory_space<vmem>>, %arg5: memref<1x128xf32, #tpu.memory_space<vmem>>, %arg6: memref<1x128xf32, #tpu.memory_space<vmem>>, %arg7: memref<256x128xf32, #tpu.memory_space<vmem>>) attributes {dimension_semantics = [#tpu.dimension_semantics<parallel>, #tpu.dimension_semantics<arbitrary>], iteration_bounds = array<i64: 1, 1>, scalar_prefetch = 0 : i64, scratch_operands = 1 : i64, tpu.core_type = #tpu.core_type<tc>, window_params = [{transform_indices = @transform_0, window_bounds = array<i64: 256, 256>}, {transform_indices = @transform_1, window_bounds = array<i64: 256, 128>}, {transform_indices = @transform_2, window_bounds = array<i64: 256, 128>}, {transform_indices = @transform_3, window_bounds = array<i64: 1, 128>}, {transform_indices = @transform_4, window_bounds = array<i64: 1, 128>}]} {
    %c0_i32 = arith.constant 0 : i32
    %0 = arith.cmpi eq, %arg1, %c0_i32 : i32
    %1 = arith.extui %0 : i1 to i32
    %c0_i32_0 = arith.constant 0 : i32
    %2 = arith.cmpi ne, %1, %c0_i32_0 : i32
    scf.if %2 {
      %cst_10 = arith.constant 0.000000e+00 : f32
      %12 = vector.broadcast %cst_10 : f32 to vector<256x128xf32>
      %c0_11 = arith.constant 0 : index
      %c0_12 = arith.constant 0 : index
      %13 = vector.load %arg7[%c0_11, %c0_12] : memref<256x128xf32, #tpu.memory_space<vmem>>, vector<256x128xf32>
      tpu.vector_store %arg7[%c0_11, %c0_12], %12 {strides = array<i32>} : memref<256x128xf32, #tpu.memory_space<vmem>>, vector<256x128xf32>,
    } else {
    }
    %c0 = arith.constant 0 : index
    %c0_1 = arith.constant 0 : index
    %3 = vector.load %arg7[%c0, %c0_1] : memref<256x128xf32, #tpu.memory_space<vmem>>, vector<256x128xf32>
    %c0_2 = arith.constant 0 : index
    %c0_3 = arith.constant 0 : index
    %4 = vector.load %arg2[%c0_2, %c0_3] : memref<256x256xbf16, #tpu.memory_space<vmem>>, vector<256x256xbf16>
    %c0_4 = arith.constant 0 : index
    %c0_5 = arith.constant 0 : index
    %5 = vector.load %arg3[%c0_4, %c0_5] : memref<256x128xbf16, #tpu.memory_space<vmem>>, vector<256x128xbf16>
    %cst = arith.constant dense<0.000000e+00> : vector<256x128xf32>
    %6 = tpu.matmul %4, %5, %cst {dimension_numbers = #tpu.dot_dimension_numbers<[1], [0], [0], [1], [0, 0, 1, 1], [], []>} : vector<256x256xbf16>, vector<256x128xbf16>, vector<256x128xf32> -> vector<256x128xf32>
    %7 = arith.addf %3, %6 : vector<256x128xf32>
    %c0_6 = arith.constant 0 : index
    %c0_7 = arith.constant 0 : index
    %8 = vector.load %arg7[%c0_6, %c0_7] : memref<256x128xf32, #tpu.memory_space<vmem>>, vector<256x128xf32>
    tpu.vector_store %arg7[%c0_6, %c0_7], %7 {strides = array<i32>} : memref<256x128xf32, #tpu.memory_space<vmem>>, vector<256x128xf32>,
    %c0_i32_8 = arith.constant 0 : i32
    %9 = arith.cmpi eq, %arg1, %c0_i32_8 : i32
    %10 = arith.extui %9 : i1 to i32
    %c0_i32_9 = arith.constant 0 : i32
    %11 = arith.cmpi ne, %10, %c0_i32_9 : i32
    scf.if %11 {
      %c0_10 = arith.constant 0 : index
      %c0_11 = arith.constant 0 : index
      %12 = vector.load %arg7[%c0_10, %c0_11] : memref<256x128xf32, #tpu.memory_space<vmem>>, vector<256x128xf32>
      %13 = arith.truncf %12 : vector<256x128xf32> to vector<256x128xbf16>
      %c0_12 = arith.constant 0 : index
      %c0_13 = arith.constant 0 : index
      %14 = vector.load %arg4[%c0_12, %c0_13] : memref<256x128xbf16, #tpu.memory_space<vmem>>, vector<256x128xbf16>
      tpu.vector_store %arg4[%c0_12, %c0_13], %13 {strides = array<i32>} : memref<256x128xbf16, #tpu.memory_space<vmem>>, vector<256x128xbf16>,
      %15 = arith.extf %13 : vector<256x128xbf16> to vector<256x128xf32>
      %cst_14 = arith.constant dense<0.000000e+00> : vector<128xf32>
      %16 = vector.multi_reduction <add>, %15, %cst_14 [0] : vector<256x128xf32> to vector<128xf32>
      %17 = vector.shape_cast %16 : vector<128xf32> to vector<1x128xf32>
      %c0_15 = arith.constant 0 : index
      %c0_16 = arith.constant 0 : index
      %18 = vector.load %arg5[%c0_15, %c0_16] : memref<1x128xf32, #tpu.memory_space<vmem>>, vector<1x128xf32>
      tpu.vector_store %arg5[%c0_15, %c0_16], %17 {strides = array<i32>} : memref<1x128xf32, #tpu.memory_space<vmem>>, vector<1x128xf32>,
      %19 = arith.mulf %15, %15 : vector<256x128xf32>
      %cst_17 = arith.constant dense<0.000000e+00> : vector<128xf32>
      %20 = vector.multi_reduction <add>, %19, %cst_17 [0] : vector<256x128xf32> to vector<128xf32>
      %21 = vector.shape_cast %20 : vector<128xf32> to vector<1x128xf32>
      %c0_18 = arith.constant 0 : index
      %c0_19 = arith.constant 0 : index
      %22 = vector.load %arg6[%c0_18, %c0_19] : memref<1x128xf32, #tpu.memory_space<vmem>>, vector<1x128xf32>
      tpu.vector_store %arg6[%c0_18, %c0_19], %21 {strides = array<i32>} : memref<1x128xf32, #tpu.memory_space<vmem>>, vector<1x128xf32>,
    } else {
    }
    return
  }
  func.func @transform_0(%arg0: i32, %arg1: i32) -> (i32, i32) {
    %c0_i32 = arith.constant 0 : i32
    return %arg0, %arg1 : i32, i32
  }
  func.func @transform_1(%arg0: i32, %arg1: i32) -> (i32, i32) {
    %c0_i32 = arith.constant 0 : i32
    %c0_i32_0 = arith.constant 0 : i32
    return %arg1, %c0_i32 : i32, i32
  }
  func.func @transform_2(%arg0: i32, %arg1: i32) -> (i32, i32) {
    %c0_i32 = arith.constant 0 : i32
    %c0_i32_0 = arith.constant 0 : i32
    return %arg0, %c0_i32 : i32, i32
  }
  func.func @transform_3(%arg0: i32, %arg1: i32) -> (i32, i32) {
    %c0_i32 = arith.constant 0 : i32
    %c0_i32_0 = arith.constant 0 : i32
    return %arg0, %c0_i32 : i32, i32
  }
  func.func @transform_4(%arg0: i32, %arg1: i32) -> (i32, i32) {
    %c0_i32 = arith.constant 0 : i32
    %c0_i32_0 = arith.constant 0 : i32
    return %arg0, %c0_i32 : i32, i32
  }
}

module attributes {stable_mosaic.version = 11 : i64} {
  func.func @_p2_kernel(%arg0: i32, %arg1: memref<256x128xbf16, #tpu.memory_space<vmem>>, %arg2: memref<1x128xf32, #tpu.memory_space<vmem>>, %arg3: memref<1x128xf32, #tpu.memory_space<vmem>>, %arg4: memref<128x128xbf16, #tpu.memory_space<vmem>>, %arg5: memref<256x128xbf16, #tpu.memory_space<vmem>>, %arg6: memref<1x128xf32, #tpu.memory_space<vmem>>, %arg7: memref<1x128xf32, #tpu.memory_space<vmem>>) attributes {dimension_semantics = [#tpu.dimension_semantics<parallel>], iteration_bounds = array<i64: 1>, scalar_prefetch = 0 : i64, scratch_operands = 0 : i64, tpu.core_type = #tpu.core_type<tc>, window_params = [{transform_indices = @transform_0, window_bounds = array<i64: 256, 128>}, {pipeline_mode = #tpu.pipeline_mode<synchronous>, transform_indices = @transform_1, window_bounds = array<i64: 1, 128>}, {pipeline_mode = #tpu.pipeline_mode<synchronous>, transform_indices = @transform_2, window_bounds = array<i64: 1, 128>}, {pipeline_mode = #tpu.pipeline_mode<synchronous>, transform_indices = @transform_3, window_bounds = array<i64: 128, 128>}, {transform_indices = @transform_4, window_bounds = array<i64: 256, 128>}, {transform_indices = @transform_5, window_bounds = array<i64: 1, 128>}, {transform_indices = @transform_6, window_bounds = array<i64: 1, 128>}]} {
    %c0 = arith.constant 0 : index
    %c0_0 = arith.constant 0 : index
    %0 = vector.load %arg1[%c0, %c0_0] : memref<256x128xbf16, #tpu.memory_space<vmem>>, vector<256x128xbf16>
    %1 = arith.extf %0 : vector<256x128xbf16> to vector<256x128xf32>
    %c0_1 = arith.constant 0 : index
    %c0_2 = arith.constant 0 : index
    %2 = vector.load %arg2[%c0_1, %c0_2] : memref<1x128xf32, #tpu.memory_space<vmem>>, vector<1x128xf32>
    %3 = vector.broadcast %2 : vector<1x128xf32> to vector<256x128xf32>
    %4 = arith.mulf %1, %3 : vector<256x128xf32>
    %c0_3 = arith.constant 0 : index
    %c0_4 = arith.constant 0 : index
    %5 = vector.load %arg3[%c0_3, %c0_4] : memref<1x128xf32, #tpu.memory_space<vmem>>, vector<1x128xf32>
    %6 = vector.broadcast %5 : vector<1x128xf32> to vector<256x128xf32>
    %7 = arith.addf %4, %6 : vector<256x128xf32>
    %cst = arith.constant 0.000000e+00 : f32
    %8 = vector.broadcast %cst : f32 to vector<256x128xf32>
    %9 = arith.maximumf %7, %8 : vector<256x128xf32>
    %c0_5 = arith.constant 0 : index
    %c0_6 = arith.constant 0 : index
    %10 = vector.load %arg4[%c0_5, %c0_6] : memref<128x128xbf16, #tpu.memory_space<vmem>>, vector<128x128xbf16>
    %c0_i32 = arith.constant 0 : i32
    %11 = arith.cmpi slt, %arg0, %c0_i32 : i32
    %12 = arith.extui %11 : i1 to i32
    %c0_i32_7 = arith.constant 0 : i32
    %13 = arith.cmpi ne, %12, %c0_i32_7 : i32
    scf.if %13 {
      %17 = arith.truncf %9 : vector<256x128xf32> to vector<256x128xbf16>
      %cst_10 = arith.constant dense<0.000000e+00> : vector<256x128xf32>
      %18 = tpu.matmul %17, %10, %cst_10 {dimension_numbers = #tpu.dot_dimension_numbers<[1], [0], [0], [1], [0, 0, 1, 1], [], []>} : vector<256x128xbf16>, vector<128x128xbf16>, vector<256x128xf32> -> vector<256x128xf32>
      %19 = arith.truncf %18 : vector<256x128xf32> to vector<256x128xbf16>
      %c0_11 = arith.constant 0 : index
      %c0_12 = arith.constant 0 : index
      %20 = vector.load %arg5[%c0_11, %c0_12] : memref<256x128xbf16, #tpu.memory_space<vmem>>, vector<256x128xbf16>
      tpu.vector_store %arg5[%c0_11, %c0_12], %19 {strides = array<i32>} : memref<256x128xbf16, #tpu.memory_space<vmem>>, vector<256x128xbf16>,
      %21 = arith.extf %19 : vector<256x128xbf16> to vector<256x128xf32>
      %cst_13 = arith.constant dense<0.000000e+00> : vector<128xf32>
      %22 = vector.multi_reduction <add>, %21, %cst_13 [0] : vector<256x128xf32> to vector<128xf32>
      %23 = vector.shape_cast %22 : vector<128xf32> to vector<1x128xf32>
      %c0_14 = arith.constant 0 : index
      %c0_15 = arith.constant 0 : index
      %24 = vector.load %arg6[%c0_14, %c0_15] : memref<1x128xf32, #tpu.memory_space<vmem>>, vector<1x128xf32>
      tpu.vector_store %arg6[%c0_14, %c0_15], %23 {strides = array<i32>} : memref<1x128xf32, #tpu.memory_space<vmem>>, vector<1x128xf32>,
      %25 = arith.mulf %21, %21 : vector<256x128xf32>
      %cst_16 = arith.constant dense<0.000000e+00> : vector<128xf32>
      %26 = vector.multi_reduction <add>, %25, %cst_16 [0] : vector<256x128xf32> to vector<128xf32>
      %27 = vector.shape_cast %26 : vector<128xf32> to vector<1x128xf32>
      %c0_17 = arith.constant 0 : index
      %c0_18 = arith.constant 0 : index
      %28 = vector.load %arg7[%c0_17, %c0_18] : memref<1x128xf32, #tpu.memory_space<vmem>>, vector<1x128xf32>
      tpu.vector_store %arg7[%c0_17, %c0_18], %27 {strides = array<i32>} : memref<1x128xf32, #tpu.memory_space<vmem>>, vector<1x128xf32>,
    } else {
    }
    %c0_i32_8 = arith.constant 0 : i32
    %14 = arith.cmpi eq, %arg0, %c0_i32_8 : i32
    %15 = arith.extui %14 : i1 to i32
    %c0_i32_9 = arith.constant 0 : i32
    %16 = arith.cmpi ne, %15, %c0_i32_9 : i32
    scf.if %16 {
      %c256_i32 = arith.constant 256 : i32
      %17 = arith.muli %arg0, %c256_i32 : i32
      %18 = tpu.iota {dimensions = array<i32: 0>} : vector<256x128xi32>
      %19 = vector.broadcast %17 : i32 to vector<256x128xi32>
      %20 = arith.addi %19, %18 : vector<256x128xi32>
      %c8_i32 = arith.constant 8 : i32
      %21 = vector.broadcast %c8_i32 : i32 to vector<256x128xi32>
      %22 = arith.cmpi slt, %20, %21 : vector<256x128xi32>
      %cst_10 = arith.constant 0.000000e+00 : f32
      %23 = vector.broadcast %cst_10 : f32 to vector<256x128xf32>
      %24 = arith.select %22, %9, %23 : vector<256x128xi1>, vector<256x128xf32>
      %25 = arith.truncf %24 : vector<256x128xf32> to vector<256x128xbf16>
      %cst_11 = arith.constant dense<0.000000e+00> : vector<256x128xf32>
      %26 = tpu.matmul %25, %10, %cst_11 {dimension_numbers = #tpu.dot_dimension_numbers<[1], [0], [0], [1], [0, 0, 1, 1], [], []>} : vector<256x128xbf16>, vector<128x128xbf16>, vector<256x128xf32> -> vector<256x128xf32>
      %27 = arith.truncf %26 : vector<256x128xf32> to vector<256x128xbf16>
      %c0_12 = arith.constant 0 : index
      %c0_13 = arith.constant 0 : index
      %28 = vector.load %arg5[%c0_12, %c0_13] : memref<256x128xbf16, #tpu.memory_space<vmem>>, vector<256x128xbf16>
      tpu.vector_store %arg5[%c0_12, %c0_13], %27 {strides = array<i32>} : memref<256x128xbf16, #tpu.memory_space<vmem>>, vector<256x128xbf16>,
      %29 = arith.extf %27 : vector<256x128xbf16> to vector<256x128xf32>
      %cst_14 = arith.constant dense<0.000000e+00> : vector<128xf32>
      %30 = vector.multi_reduction <add>, %29, %cst_14 [0] : vector<256x128xf32> to vector<128xf32>
      %31 = vector.shape_cast %30 : vector<128xf32> to vector<1x128xf32>
      %c0_15 = arith.constant 0 : index
      %c0_16 = arith.constant 0 : index
      %32 = vector.load %arg6[%c0_15, %c0_16] : memref<1x128xf32, #tpu.memory_space<vmem>>, vector<1x128xf32>
      tpu.vector_store %arg6[%c0_15, %c0_16], %31 {strides = array<i32>} : memref<1x128xf32, #tpu.memory_space<vmem>>, vector<1x128xf32>,
      %33 = arith.mulf %29, %29 : vector<256x128xf32>
      %cst_17 = arith.constant dense<0.000000e+00> : vector<128xf32>
      %34 = vector.multi_reduction <add>, %33, %cst_17 [0] : vector<256x128xf32> to vector<128xf32>
      %35 = vector.shape_cast %34 : vector<128xf32> to vector<1x128xf32>
      %c0_18 = arith.constant 0 : index
      %c0_19 = arith.constant 0 : index
      %36 = vector.load %arg7[%c0_18, %c0_19] : memref<1x128xf32, #tpu.memory_space<vmem>>, vector<1x128xf32>
      tpu.vector_store %arg7[%c0_18, %c0_19], %35 {strides = array<i32>} : memref<1x128xf32, #tpu.memory_space<vmem>>, vector<1x128xf32>,
    } else {
    }
    return
  }
  func.func @transform_0(%arg0: i32) -> (i32, i32) {
    %c0_i32 = arith.constant 0 : i32
    %c0_i32_0 = arith.constant 0 : i32
    return %arg0, %c0_i32 : i32, i32
  }
  func.func @transform_1(%arg0: i32) -> (i32, i32) {
    %c0_i32 = arith.constant 0 : i32
    %c0_i32_0 = arith.constant 0 : i32
    %c0_i32_1 = arith.constant 0 : i32
    return %c0_i32, %c0_i32_0 : i32, i32
  }
  func.func @transform_2(%arg0: i32) -> (i32, i32) {
    %c0_i32 = arith.constant 0 : i32
    %c0_i32_0 = arith.constant 0 : i32
    %c0_i32_1 = arith.constant 0 : i32
    return %c0_i32, %c0_i32_0 : i32, i32
  }
  func.func @transform_3(%arg0: i32) -> (i32, i32) {
    %c0_i32 = arith.constant 0 : i32
    %c0_i32_0 = arith.constant 0 : i32
    %c0_i32_1 = arith.constant 0 : i32
    return %c0_i32, %c0_i32_0 : i32, i32
  }
  func.func @transform_4(%arg0: i32) -> (i32, i32) {
    %c0_i32 = arith.constant 0 : i32
    %c0_i32_0 = arith.constant 0 : i32
    return %arg0, %c0_i32 : i32, i32
  }
  func.func @transform_5(%arg0: i32) -> (i32, i32) {
    %c0_i32 = arith.constant 0 : i32
    %c0_i32_0 = arith.constant 0 : i32
    return %arg0, %c0_i32 : i32, i32
  }
  func.func @transform_6(%arg0: i32) -> (i32, i32) {
    %c0_i32 = arith.constant 0 : i32
    %c0_i32_0 = arith.constant 0 : i32
    return %arg0, %c0_i32 : i32, i32
  }
}

</mosaic_0001>

<llo_original>
// kernel: gin_edge_aggregator.5
$region0: #{gin_edge_aggregator.5}
  #allocation0 [shape = 'u32[]', space=smem, size = 0x4, offset = 0x4, fixed_abs, tag = 'smem constant byte address 0x4 - core index']
  #allocation1 [shape = 'u32[144,128]{1,0:T(1,128)}', space=vmem, size = 0x12000, scoped, tag = 'internal scratch']
  %s0 = inlined_call_operand.vmem [shape: bf16[256,128], index: 0, kind: input, shape index: {}]
  %s1 = inlined_call_operand.vmem [shape: f32[1,128], index: 1, kind: input, shape index: {}]
  %s2 = inlined_call_operand.vmem [shape: f32[1,128], index: 2, kind: input, shape index: {}]
  %s3 = inlined_call_operand.vmem [shape: f32[256,128], index: 3, kind: output, shape index: {}]
  %s4 = sld [smem:[#allocation0]]
  $region22: #{gin_edge_aggregator.5} parent=0
    _
  %s6 = ssub.s32 1, %s4
  %s7 = scalar_select 0, %s6, %s4
  // Predicated region
  $region2: #{gin_edge_aggregator.5} parent=0 // pred_check
    _
  $region3: #{gin_edge_aggregator.5} parent=0 // pred_check_branch
    %9 = sbr.rel (0) target = $region5
  $region4: #{gin_edge_aggregator.5} parent=0 // pred_region
    _
  $region5: #{gin_edge_aggregator.5} parent=0 // pred_fallthru
    _
  // Predicated region
  $region6: #{gin_edge_aggregator.5} parent=0 // pred_check
    _
  $region7: #{gin_edge_aggregator.5} parent=0 // pred_check_branch
    %11 = sbr.rel (0) target = $region9
  $region8: #{gin_edge_aggregator.5} parent=0 // pred_region
    _
  $region9: #{gin_edge_aggregator.5} parent=0 // pred_fallthru
    _
  // Predicated region
  $region10: #{gin_edge_aggregator.5} parent=0 // pred_check
    _
  $region11: #{gin_edge_aggregator.5} parent=0 // pred_check_branch
    %13 = sbr.rel (0) target = $region13
  $region12: #{gin_edge_aggregator.5} parent=0 // pred_region
    _
  $region13: #{gin_edge_aggregator.5} parent=0 // pred_fallthru
    _
  %v14 = vld [vmem:[%s0] sm:$0xf]
  %v15 = vld [vmem:[%s0 + $0x4] sm:$0xf]
  %v16 = vld [vmem:[%s0 + $0x8] sm:$0xf]
  %v17 = vld [vmem:[%s0 + $0xc] sm:$0xf]
  %v18 = vld [vmem:[%s0 + $0x10] sm:$0xf]
  %v19 = vld [vmem:[%s0 + $0x14] sm:$0xf]
  %v20 = vld [vmem:[%s0 + $0x18] sm:$0xf]
  %v21 = vld [vmem:[%s0 + $0x1c] sm:$0xf]
  %v22 = vld [vmem:[%s0 + $0x20] sm:$0xf]
  %v23 = vld [vmem:[%s0 + $0x24] sm:$0xf]
  %v24 = vld [vmem:[%s0 + $0x28] sm:$0xf]
  %v25 = vld [vmem:[%s0 + $0x2c] sm:$0xf]
  %v26 = vld [vmem:[%s0 + $0x30] sm:$0xf]
  %v27 = vld [vmem:[%s0 + $0x34] sm:$0xf]
  %v28 = vld [vmem:[%s0 + $0x38] sm:$0xf]
  %v29 = vld [vmem:[%s0 + $0x3c] sm:$0xf]
  %v30 = vld [vmem:[%s0 + $0x40] sm:$0xf]
  %v31 = vld [vmem:[%s0 + $0x44] sm:$0xf]
  %v32 = vld [vmem:[%s0 + $0x48] sm:$0xf]
  %v33 = vld [vmem:[%s0 + $0x4c] sm:$0xf]
  %v34 = vld [vmem:[%s0 + $0x50] sm:$0xf]
  %v35 = vld [vmem:[%s0 + $0x54] sm:$0xf]
  %v36 = vld [vmem:[%s0 + $0x58] sm:$0xf]
  %v37 = vld [vmem:[%s0 + $0x5c] sm:$0xf]
  %v38 = vld [vmem:[%s0 + $0x60] sm:$0xf]
  %v39 = vld [vmem:[%s0 + $0x64] sm:$0xf]
  %v40 = vld [vmem:[%s0 + $0x68] sm:$0xf]
  %v41 = vld [vmem:[%s0 + $0x6c] sm:$0xf]
  %v42 = vld [vmem:[%s0 + $0x70] sm:$0xf]
  %v43 = vld [vmem:[%s0 + $0x74] sm:$0xf]
  %v44 = vld [vmem:[%s0 + $0x78] sm:$0xf]
  %v45 = vld [vmem:[%s0 + $0x7c] sm:$0xf]
  %v46 = vunpack.c.l.bf16 %v14
  %v47 = vunpack.c.l.bf16 %v15
  %v48 = vunpack.c.l.bf16 %v16
  %v49 = vunpack.c.l.bf16 %v17
  %v50 = vunpack.c.l.bf16 %v18
  %v51 = vunpack.c.l.bf16 %v19
  %v52 = vunpack.c.l.bf16 %v20
  %v53 = vunpack.c.l.bf16 %v21
  %v54 = vunpack.c.l.bf16 %v22
  %v55 = vunpack.c.l.bf16 %v23
  %v56 = vunpack.c.l.bf16 %v24
  %v57 = vunpack.c.l.bf16 %v25
  %v58 = vunpack.c.l.bf16 %v26
  %v59 = vunpack.c.l.bf16 %v27
  %v60 = vunpack.c.l.bf16 %v28
  %v61 = vunpack.c.l.bf16 %v29
  %v62 = vunpack.c.l.bf16 %v30
  %v63 = vunpack.c.l.bf16 %v31
  %v64 = vunpack.c.l.bf16 %v32
  %v65 = vunpack.c.l.bf16 %v33
  %v66 = vunpack.c.l.bf16 %v34
  %v67 = vunpack.c.l.bf16 %v35
  %v68 = vunpack.c.l.bf16 %v36
  %v69 = vunpack.c.l.bf16 %v37
  %v70 = vunpack.c.l.bf16 %v38
  %v71 = vunpack.c.l.bf16 %v39
  %v72 = vunpack.c.l.bf16 %v40
  %v73 = vunpack.c.l.bf16 %v41
  %v74 = vunpack.c.l.bf16 %v42
  %v75 = vunpack.c.l.bf16 %v43
  %v76 = vunpack.c.l.bf16 %v44
  %v77 = vunpack.c.l.bf16 %v45
  %v78 = vld [vmem:[%s1] sm:$0x1]
  %v80 = vlaneseq
  %v81 = vshrl.u32 %v80, 7
  %v82 = vsub.s32 0, %v81
  %v83 = vrot.slane %v78, %v82
  %v85 = vmul.f32 %v46, %v83
  %v86 = vmul.f32 %v47, %v83
  %v87 = vmul.f32 %v48, %v83
  %v88 = vmul.f32 %v49, %v83
  %v89 = vmul.f32 %v50, %v83
  %v90 = vmul.f32 %v51, %v83
  %v91 = vmul.f32 %v52, %v83
  %v92 = vmul.f32 %v53, %v83
  %v93 = vmul.f32 %v54, %v83
  %v94 = vmul.f32 %v55, %v83
  %v95 = vmul.f32 %v56, %v83
  %v96 = vmul.f32 %v57, %v83
  %v97 = vmul.f32 %v58, %v83
  %v98 = vmul.f32 %v59, %v83
  %v99 = vmul.f32 %v60, %v83
  %v100 = vmul.f32 %v61, %v83
  %v101 = vmul.f32 %v62, %v83
  %v102 = vmul.f32 %v63, %v83
  %v103 = vmul.f32 %v64, %v83
  %v104 = vmul.f32 %v65, %v83
  %v105 = vmul.f32 %v66, %v83
  %v106 = vmul.f32 %v67, %v83
  %v107 = vmul.f32 %v68, %v83
  %v108 = vmul.f32 %v69, %v83
  %v109 = vmul.f32 %v70, %v83
  %v110 = vmul.f32 %v71, %v83
  %v111 = vmul.f32 %v72, %v83
  %v112 = vmul.f32 %v73, %v83
  %v113 = vmul.f32 %v74, %v83
  %v114 = vmul.f32 %v75, %v83
  %v115 = vmul.f32 %v76, %v83
  %v116 = vmul.f32 %v77, %v83
  %v117 = vld [vmem:[%s2] sm:$0x1]
  %v119 = vlaneseq
  %v120 = vshrl.u32 %v119, 7
  %v121 = vsub.s32 0, %v120
  %v122 = vrot.slane %v117, %v121
  %v124 = vadd.f32 %v85, %v122
  %v125 = vadd.f32 %v86, %v122
  %v126 = vadd.f32 %v87, %v122
  %v127 = vadd.f32 %v88, %v122
  %v128 = vadd.f32 %v89, %v122
  %v129 = vadd.f32 %v90, %v122
  %v130 = vadd.f32 %v91, %v122
  %v131 = vadd.f32 %v92, %v122
  %v132 = vadd.f32 %v93, %v122
  %v133 = vadd.f32 %v94, %v122
  %v134 = vadd.f32 %v95, %v122
  %v135 = vadd.f32 %v96, %v122
  %v136 = vadd.f32 %v97, %v122
  %v137 = vadd.f32 %v98, %v122
  %v138 = vadd.f32 %v99, %v122
  %v139 = vadd.f32 %v100, %v122
  %v140 = vadd.f32 %v101, %v122
  %v141 = vadd.f32 %v102, %v122
  %v142 = vadd.f32 %v103, %v122
  %v143 = vadd.f32 %v104, %v122
  %v144 = vadd.f32 %v105, %v122
  %v145 = vadd.f32 %v106, %v122
  %v146 = vadd.f32 %v107, %v122
  %v147 = vadd.f32 %v108, %v122
  %v148 = vadd.f32 %v109, %v122
  %v149 = vadd.f32 %v110, %v122
  %v150 = vadd.f32 %v111, %v122
  %v151 = vadd.f32 %v112, %v122
  %v152 = vadd.f32 %v113, %v122
  %v153 = vadd.f32 %v114, %v122
  %v154 = vadd.f32 %v115, %v122
  %v155 = vadd.f32 %v116, %v122
  %v156 = vmax.f32 %v124, 0.0
  %v157 = vmax.f32 %v125, 0.0
  %v158 = vmax.f32 %v126, 0.0
  %v159 = vmax.f32 %v127, 0.0
  %v160 = vmax.f32 %v128, 0.0
  %v161 = vmax.f32 %v129, 0.0
  %v162 = vmax.f32 %v130, 0.0
  %v163 = vmax.f32 %v131, 0.0
  %v164 = vmax.f32 %v132, 0.0
  %v165 = vmax.f32 %v133, 0.0
  %v166 = vmax.f32 %v134, 0.0
  %v167 = vmax.f32 %v135, 0.0
  %v168 = vmax.f32 %v136, 0.0
  %v169 = vmax.f32 %v137, 0.0
  %v170 = vmax.f32 %v138, 0.0
  %v171 = vmax.f32 %v139, 0.0
  %v172 = vmax.f32 %v140, 0.0
  %v173 = vmax.f32 %v141, 0.0
  %v174 = vmax.f32 %v142, 0.0
  %v175 = vmax.f32 %v143, 0.0
  %v176 = vmax.f32 %v144, 0.0
  %v177 = vmax.f32 %v145, 0.0
  %v178 = vmax.f32 %v146, 0.0
  %v179 = vmax.f32 %v147, 0.0
  %v180 = vmax.f32 %v148, 0.0
  %v181 = vmax.f32 %v149, 0.0
  %v182 = vmax.f32 %v150, 0.0
  %v183 = vmax.f32 %v151, 0.0
  %v184 = vmax.f32 %v152, 0.0
  %v185 = vmax.f32 %v153, 0.0
  %v186 = vmax.f32 %v154, 0.0
  %v187 = vmax.f32 %v155, 0.0
  %188 = vst [vmem:[%s3] sm:$0xff] %v156
  %189 = vst [vmem:[%s3 + $0x8] sm:$0xff] %v157
  %190 = vst [vmem:[%s3 + $0x10] sm:$0xff] %v158
  %191 = vst [vmem:[%s3 + $0x18] sm:$0xff] %v159
  %192 = vst [vmem:[%s3 + $0x20] sm:$0xff] %v160
  %193 = vst [vmem:[%s3 + $0x28] sm:$0xff] %v161
  %194 = vst [vmem:[%s3 + $0x30] sm:$0xff] %v162
  %195 = vst [vmem:[%s3 + $0x38] sm:$0xff] %v163
  %196 = vst [vmem:[%s3 + $0x40] sm:$0xff] %v164
  %197 = vst [vmem:[%s3 + $0x48] sm:$0xff] %v165
  %198 = vst [vmem:[%s3 + $0x50] sm:$0xff] %v166
  %199 = vst [vmem:[%s3 + $0x58] sm:$0xff] %v167
  %200 = vst [vmem:[%s3 + $0x60] sm:$0xff] %v168
  %201 = vst [vmem:[%s3 + $0x68] sm:$0xff] %v169
  %202 = vst [vmem:[%s3 + $0x70] sm:$0xff] %v170
  %203 = vst [vmem:[%s3 + $0x78] sm:$0xff] %v171
  %204 = vst [vmem:[%s3 + $0x80] sm:$0xff] %v172
  %205 = vst [vmem:[%s3 + $0x88] sm:$0xff] %v173
  %206 = vst [vmem:[%s3 + $0x90] sm:$0xff] %v174
  %207 = vst [vmem:[%s3 + $0x98] sm:$0xff] %v175
  %208 = vst [vmem:[%s3 + $0xa0] sm:$0xff] %v176
  %209 = vst [vmem:[%s3 + $0xa8] sm:$0xff] %v177
  %210 = vst [vmem:[%s3 + $0xb0] sm:$0xff] %v178
  %211 = vst [vmem:[%s3 + $0xb8] sm:$0xff] %v179
  %212 = vst [vmem:[%s3 + $0xc0] sm:$0xff] %v180
  %213 = vst [vmem:[%s3 + $0xc8] sm:$0xff] %v181
  %214 = vst [vmem:[%s3 + $0xd0] sm:$0xff] %v182
  %215 = vst [vmem:[%s3 + $0xd8] sm:$0xff] %v183
  %216 = vst [vmem:[%s3 + $0xe0] sm:$0xff] %v184
  %217 = vst [vmem:[%s3 + $0xe8] sm:$0xff] %v185
  %218 = vst [vmem:[%s3 + $0xf0] sm:$0xff] %v186
  %219 = vst [vmem:[%s3 + $0xf8] sm:$0xff] %v187
  // Predicated region
  $region14: #{gin_edge_aggregator.5} parent=0 // pred_check
    _
  $region15: #{gin_edge_aggregator.5} parent=0 // pred_check_branch
    %221 = sbr.rel (0) target = $region17
  $region16: #{gin_edge_aggregator.5} parent=0 // pred_region
    _
  $region17: #{gin_edge_aggregator.5} parent=0 // pred_fallthru
    _
  // Predicated region
  $region18: #{gin_edge_aggregator.5} parent=0 // pred_check
    _
  $region19: #{gin_edge_aggregator.5} parent=0 // pred_check_branch
    %223 = sbr.rel (0) target = $region21
  $region20: #{gin_edge_aggregator.5} parent=0 // pred_region
    _
  $region21: #{gin_edge_aggregator.5} parent=0 // pred_fallthru
    _

// kernel: gin_edge_aggregator.3
$region0: #{gin_edge_aggregator.3}
  #allocation0 [shape = 'u32[]', space=smem, size = 0x4, offset = 0x4, fixed_abs, tag = 'smem constant byte address 0x4 - core index']
  #allocation1 [shape = 'u32[144,128]{1,0:T(1,128)}', space=vmem, size = 0x12000, scoped, tag = 'internal scratch']
  #allocation2 [shape = 'f32[256,128]{1,0:T(8,128)}', space=vmem, size = 0x20000, scoped, tag = 'scratch operand']
  %s0 = inlined_call_operand.vmem [shape: bf16[256,256], index: 0, kind: input, shape index: {}]
  %s1 = inlined_call_operand.vmem [shape: bf16[256,128], index: 1, kind: input, shape index: {}]
  %s2 = inlined_call_operand.vmem [shape: bf16[256,128], index: 2, kind: output, shape index: {0}]
  %s3 = inlined_call_operand.vmem [shape: f32[1,128], index: 3, kind: output, shape index: {1}]
  %s4 = inlined_call_operand.vmem [shape: f32[1,128], index: 4, kind: output, shape index: {2}]
  %5 = xla_tuple %s2, %s3, %s4
  %s6 = sld [smem:[#allocation0]]
  $region42: #{gin_edge_aggregator.3} parent=0
    _
  %s8 = ssub.s32 1, %s6
  %s9 = scalar_select 0, %s8, %s6
  // Predicated region
  $region2: #{gin_edge_aggregator.3} parent=0 // pred_check
    _
  $region3: #{gin_edge_aggregator.3} parent=0 // pred_check_branch
    %11 = sbr.rel (0) target = $region5
  $region4: #{gin_edge_aggregator.3} parent=0 // pred_region
    _
  $region5: #{gin_edge_aggregator.3} parent=0 // pred_fallthru
    _
  // Predicated region
  $region6: #{gin_edge_aggregator.3} parent=0 // pred_check
    _
  $region7: #{gin_edge_aggregator.3} parent=0 // pred_check_branch
    %13 = sbr.rel (0) target = $region9
  $region8: #{gin_edge_aggregator.3} parent=0 // pred_region
    _
  $region9: #{gin_edge_aggregator.3} parent=0 // pred_fallthru
    _
  %p15 = scmp.eq.s32.totalorder 0, 0
  // Predicated region
  $region10: #{gin_edge_aggregator.3} parent=0 // pred_check
    %p16 = pneg %p15
  $region11: #{gin_edge_aggregator.3} parent=0 // pred_check_branch
    %18 = sbr.rel (%p16) target = $region13
  $region12: #{gin_edge_aggregator.3} parent=0 // pred_region
    %19 = vst [vmem:[#allocation2] sm:$0xff] 0.0
    %20 = vst [vmem:[#allocation2 + $0x8] sm:$0xff] 0.0
    %21 = vst [vmem:[#allocation2 + $0x10] sm:$0xff] 0.0
    %22 = vst [vmem:[#allocation2 + $0x18] sm:$0xff] 0.0
    %23 = vst [vmem:[#allocation2 + $0x20] sm:$0xff] 0.0
    %24 = vst [vmem:[#allocation2 + $0x28] sm:$0xff] 0.0
    %25 = vst [vmem:[#allocation2 + $0x30] sm:$0xff] 0.0
    %26 = vst [vmem:[#allocation2 + $0x38] sm:$0xff] 0.0
    %27 = vst [vmem:[#allocation2 + $0x40] sm:$0xff] 0.0
    %28 = vst [vmem:[#allocation2 + $0x48] sm:$0xff] 0.0
    %29 = vst [vmem:[#allocation2 + $0x50] sm:$0xff] 0.0
    %30 = vst [vmem:[#allocation2 + $0x58] sm:$0xff] 0.0
    %31 = vst [vmem:[#allocation2 + $0x60] sm:$0xff] 0.0
    %32 = vst [vmem:[#allocation2 + $0x68] sm:$0xff] 0.0
    %33 = vst [vmem:[#allocation2 + $0x70] sm:$0xff] 0.0
    %34 = vst [vmem:[#allocation2 + $0x78] sm:$0xff] 0.0
    %35 = vst [vmem:[#allocation2 + $0x80] sm:$0xff] 0.0
    %36 = vst [vmem:[#allocation2 + $0x88] sm:$0xff] 0.0
    %37 = vst [vmem:[#allocation2 + $0x90] sm:$0xff] 0.0
    %38 = vst [vmem:[#allocation2 + $0x98] sm:$0xff] 0.0
    %39 = vst [vmem:[#allocation2 + $0xa0] sm:$0xff] 0.0
    %40 = vst [vmem:[#allocation2 + $0xa8] sm:$0xff] 0.0
    %41 = vst [vmem:[#allocation2 + $0xb0] sm:$0xff] 0.0
    %42 = vst [vmem:[#allocation2 + $0xb8] sm:$0xff] 0.0
    %43 = vst [vmem:[#allocation2 + $0xc0] sm:$0xff] 0.0
    %44 = vst [vmem:[#allocation2 + $0xc8] sm:$0xff] 0.0
    %45 = vst [vmem:[#allocation2 + $0xd0] sm:$0xff] 0.0
    %46 = vst [vmem:[#allocation2 + $0xd8] sm:$0xff] 0.0
    %47 = vst [vmem:[#allocation2 + $0xe0] sm:$0xff] 0.0
    %48 = vst [vmem:[#allocation2 + $0xe8] sm:$0xff] 0.0
    %49 = vst [vmem:[#allocation2 + $0xf0] sm:$0xff] 0.0
    %50 = vst [vmem:[#allocation2 + $0xf8] sm:$0xff] 0.0
  $region13: #{gin_edge_aggregator.3} parent=0 // pred_fallthru
    _
  %v51 = vld [vmem:[#allocation2] sm:$0xff]
  %v52 = vld [vmem:[#allocation2 + $0x8] sm:$0xff]
  %v53 = vld [vmem:[#allocation2 + $0x10] sm:$0xff]
  %v54 = vld [vmem:[#allocation2 + $0x18] sm:$0xff]
  %v55 = vld [vmem:[#allocation2 + $0x20] sm:$0xff]
  %v56 = vld [vmem:[#allocation2 + $0x28] sm:$0xff]
  %v57 = vld [vmem:[#allocation2 + $0x30] sm:$0xff]
  %v58 = vld [vmem:[#allocation2 + $0x38] sm:$0xff]
  %v59 = vld [vmem:[#allocation2 + $0x40] sm:$0xff]
  %v60 = vld [vmem:[#allocation2 + $0x48] sm:$0xff]
  %v61 = vld [vmem:[#allocation2 + $0x50] sm:$0xff]
  %v62 = vld [vmem:[#allocation2 + $0x58] sm:$0xff]
  %v63 = vld [vmem:[#allocation2 + $0x60] sm:$0xff]
  %v64 = vld [vmem:[#allocation2 + $0x68] sm:$0xff]
  %v65 = vld [vmem:[#allocation2 + $0x70] sm:$0xff]
  %v66 = vld [vmem:[#allocation2 + $0x78] sm:$0xff]
  %v67 = vld [vmem:[#allocation2 + $0x80] sm:$0xff]
  %v68 = vld [vmem:[#allocation2 + $0x88] sm:$0xff]
  %v69 = vld [vmem:[#allocation2 + $0x90] sm:$0xff]
  %v70 = vld [vmem:[#allocation2 + $0x98] sm:$0xff]
  %v71 = vld [vmem:[#allocation2 + $0xa0] sm:$0xff]
  %v72 = vld [vmem:[#allocation2 + $0xa8] sm:$0xff]
  %v73 = vld [vmem:[#allocation2 + $0xb0] sm:$0xff]
  %v74 = vld [vmem:[#allocation2 + $0xb8] sm:$0xff]
  %v75 = vld [vmem:[#allocation2 + $0xc0] sm:$0xff]
  %v76 = vld [vmem:[#allocation2 + $0xc8] sm:$0xff]
  %v77 = vld [vmem:[#allocation2 + $0xd0] sm:$0xff]
  %v78 = vld [vmem:[#allocation2 + $0xd8] sm:$0xff]
  %v79 = vld [vmem:[#allocation2 + $0xe0] sm:$0xff]
  %v80 = vld [vmem:[#allocation2 + $0xe8] sm:$0xff]
  %v81 = vld [vmem:[#allocation2 + $0xf0] sm:$0xff]
  %v82 = vld [vmem:[#allocation2 + $0xf8] sm:$0xff]
  %v83 = vld [vmem:[%s0] sm:$0xff]
  %v84 = vld [vmem:[%s0 + $0x8] sm:$0xff]
  %v85 = vld [vmem:[%s0 + $0x10] sm:$0xff]
  %v86 = vld [vmem:[%s0 + $0x18] sm:$0xff]
  %v87 = vld [vmem:[%s0 + $0x20] sm:$0xff]
  %v88 = vld [vmem:[%s0 + $0x28] sm:$0xff]
  %v89 = vld [vmem:[%s0 + $0x30] sm:$0xff]
  %v90 = vld [vmem:[%s0 + $0x38] sm:$0xff]
  %v91 = vld [vmem:[%s0 + $0x40] sm:$0xff]
  %v92 = vld [vmem:[%s0 + $0x48] sm:$0xff]
  %v93 = vld [vmem:[%s0 + $0x50] sm:$0xff]
  %v94 = vld [vmem:[%s0 + $0x58] sm:$0xff]
  %v95 = vld [vmem:[%s0 + $0x60] sm:$0xff]
  %v96 = vld [vmem:[%s0 + $0x68] sm:$0xff]
  %v97 = vld [vmem:[%s0 + $0x70] sm:$0xff]
  %v98 = vld [vmem:[%s0 + $0x78] sm:$0xff]
  %v99 = vld [vmem:[%s0 + $0x80] sm:$0xff]
  %v100 = vld [vmem:[%s0 + $0x88] sm:$0xff]
  %v101 = vld [vmem:[%s0 + $0x90] sm:$0xff]
  %v102 = vld [vmem:[%s0 + $0x98] sm:$0xff]
  %v103 = vld [vmem:[%s0 + $0xa0] sm:$0xff]
  %v104 = vld [vmem:[%s0 + $0xa8] sm:$0xff]
  %v105 = vld [vmem:[%s0 + $0xb0] sm:$0xff]
  %v106 = vld [vmem:[%s0 + $0xb8] sm:$0xff]
  %v107 = vld [vmem:[%s0 + $0xc0] sm:$0xff]
  %v108 = vld [vmem:[%s0 + $0xc8] sm:$0xff]
  %v109 = vld [vmem:[%s0 + $0xd0] sm:$0xff]
  %v110 = vld [vmem:[%s0 + $0xd8] sm:$0xff]
  %v111 = vld [vmem:[%s0 + $0xe0] sm:$0xff]
  %v112 = vld [vmem:[%s0 + $0xe8] sm:$0xff]
  %v113 = vld [vmem:[%s0 + $0xf0] sm:$0xff]
  %v114 = vld [vmem:[%s0 + $0xf8] sm:$0xff]
  %v115 = vld [vmem:[%s1] sm:$0xf]
  %v116 = vld [vmem:[%s1 + $0x4] sm:$0xf]
  %v117 = vld [vmem:[%s1 + $0x8] sm:$0xf]
  %v118 = vld [vmem:[%s1 + $0xc] sm:$0xf]
  %v119 = vld [vmem:[%s1 + $0x10] sm:$0xf]
  %v120 = vld [vmem:[%s1 + $0x14] sm:$0xf]
  %v121 = vld [vmem:[%s1 + $0x18] sm:$0xf]
  %v122 = vld [vmem:[%s1 + $0x1c] sm:$0xf]
  %v123 = vld [vmem:[%s1 + $0x20] sm:$0xf]
  %v124 = vld [vmem:[%s1 + $0x24] sm:$0xf]
  %v125 = vld [vmem:[%s1 + $0x28] sm:$0xf]
  %v126 = vld [vmem:[%s1 + $0x2c] sm:$0xf]
  %v127 = vld [vmem:[%s1 + $0x30] sm:$0xf]
  %v128 = vld [vmem:[%s1 + $0x34] sm:$0xf]
  %v129 = vld [vmem:[%s1 + $0x38] sm:$0xf]
  %v130 = vld [vmem:[%s1 + $0x3c] sm:$0xf]
  %v131 = vld [vmem:[%s1 + $0x40] sm:$0xf]
  %v132 = vld [vmem:[%s1 + $0x44] sm:$0xf]
  %v133 = vld [vmem:[%s1 + $0x48] sm:$0xf]
  %v134 = vld [vmem:[%s1 + $0x4c] sm:$0xf]
  %v135 = vld [vmem:[%s1 + $0x50] sm:$0xf]
  %v136 = vld [vmem:[%s1 + $0x54] sm:$0xf]
  %v137 = vld [vmem:[%s1 + $0x58] sm:$0xf]
  %v138 = vld [vmem:[%s1 + $0x5c] sm:$0xf]
  %v139 = vld [vmem:[%s1 + $0x60] sm:$0xf]
  %v140 = vld [vmem:[%s1 + $0x64] sm:$0xf]
  %v141 = vld [vmem:[%s1 + $0x68] sm:$0xf]
  %v142 = vld [vmem:[%s1 + $0x6c] sm:$0xf]
  %v143 = vld [vmem:[%s1 + $0x70] sm:$0xf]
  %v144 = vld [vmem:[%s1 + $0x74] sm:$0xf]
  %v145 = vld [vmem:[%s1 + $0x78] sm:$0xf]
  %v146 = vld [vmem:[%s1 + $0x7c] sm:$0xf]
  %v179 = vunpack.c.l.b16 %v83
  %v180 = vunpack.c.h.b16 %v83
  %v181 = vunpack.c.l.b16 %v84
  %v182 = vunpack.c.h.b16 %v84
  %v183 = vunpack.c.l.b16 %v85
  %v184 = vunpack.c.h.b16 %v85
  %v185 = vunpack.c.l.b16 %v86
  %v186 = vunpack.c.h.b16 %v86
  %v187 = vunpack.c.l.b16 %v87
  %v188 = vunpack.c.h.b16 %v87
  %v189 = vunpack.c.l.b16 %v88
  %v190 = vunpack.c.h.b16 %v88
  %v191 = vunpack.c.l.b16 %v89
  %v192 = vunpack.c.h.b16 %v89
  %v193 = vunpack.c.l.b16 %v90
  %v194 = vunpack.c.h.b16 %v90
  %v195 = vunpack.c.l.b16 %v91
  %v196 = vunpack.c.h.b16 %v91
  %v197 = vunpack.c.l.b16 %v92
  %v198 = vunpack.c.h.b16 %v92
  %v199 = vunpack.c.l.b16 %v93
  %v200 = vunpack.c.h.b16 %v93
  %v201 = vunpack.c.l.b16 %v94
  %v202 = vunpack.c.h.b16 %v94
  %v203 = vunpack.c.l.b16 %v95
  %v204 = vunpack.c.h.b16 %v95
  %v205 = vunpack.c.l.b16 %v96
  %v206 = vunpack.c.h.b16 %v96
  %v207 = vunpack.c.l.b16 %v97
  %v208 = vunpack.c.h.b16 %v97
  %v209 = vunpack.c.l.b16 %v98
  %v210 = vunpack.c.h.b16 %v98
  %v211 = vunpack.c.l.b16 %v99
  %v212 = vunpack.c.h.b16 %v99
  %v213 = vunpack.c.l.b16 %v100
  %v214 = vunpack.c.h.b16 %v100
  %v215 = vunpack.c.l.b16 %v101
  %v216 = vunpack.c.h.b16 %v101
  %v217 = vunpack.c.l.b16 %v102
  %v218 = vunpack.c.h.b16 %v102
  %v219 = vunpack.c.l.b16 %v103
  %v220 = vunpack.c.h.b16 %v103
  %v221 = vunpack.c.l.b16 %v104
  %v222 = vunpack.c.h.b16 %v104
  %v223 = vunpack.c.l.b16 %v105
  %v224 = vunpack.c.h.b16 %v105
  %v225 = vunpack.c.l.b16 %v106
  %v226 = vunpack.c.h.b16 %v106
  %v227 = vunpack.c.l.b16 %v107
  %v228 = vunpack.c.h.b16 %v107
  %v229 = vunpack.c.l.b16 %v108
  %v230 = vunpack.c.h.b16 %v108
  %v231 = vunpack.c.l.b16 %v109
  %v232 = vunpack.c.h.b16 %v109
  %v233 = vunpack.c.l.b16 %v110
  %v234 = vunpack.c.h.b16 %v110
  %v235 = vunpack.c.l.b16 %v111
  %v236 = vunpack.c.h.b16 %v111
  %v237 = vunpack.c.l.b16 %v112
  %v238 = vunpack.c.h.b16 %v112
  %v239 = vunpack.c.l.b16 %v113
  %v240 = vunpack.c.h.b16 %v113
  %v241 = vunpack.c.l.b16 %v114
  %v242 = vunpack.c.h.b16 %v114
  %v243 = vpack.c.b16 %v181, %v179
  %v244 = vpack.c.b16 %v182, %v180
  %v245 = vpack.c.b16 %v185, %v183
  %v246 = vpack.c.b16 %v186, %v184
  %v247 = vpack.c.b16 %v189, %v187
  %v248 = vpack.c.b16 %v190, %v188
  %v249 = vpack.c.b16 %v193, %v191
  %v250 = vpack.c.b16 %v194, %v192
  %v251 = vpack.c.b16 %v197, %v195
  %v252 = vpack.c.b16 %v198, %v196
  %v253 = vpack.c.b16 %v201, %v199
  %v254 = vpack.c.b16 %v202, %v200
  %v255 = vpack.c.b16 %v205, %v203
  %v256 = vpack.c.b16 %v206, %v204
  %v257 = vpack.c.b16 %v209, %v207
  %v258 = vpack.c.b16 %v210, %v208
  %v259 = vpack.c.b16 %v213, %v211
  %v260 = vpack.c.b16 %v214, %v212
  %v261 = vpack.c.b16 %v217, %v215
  %v262 = vpack.c.b16 %v218, %v216
  %v263 = vpack.c.b16 %v221, %v219
  %v264 = vpack.c.b16 %v222, %v220
  %v265 = vpack.c.b16 %v225, %v223
  %v266 = vpack.c.b16 %v226, %v224
  %v267 = vpack.c.b16 %v229, %v227
  %v268 = vpack.c.b16 %v230, %v228
  %v269 = vpack.c.b16 %v233, %v231
  %v270 = vpack.c.b16 %v234, %v232
  %v271 = vpack.c.b16 %v237, %v235
  %v272 = vpack.c.b16 %v238, %v236
  %v273 = vpack.c.b16 %v241, %v239
  %v274 = vpack.c.b16 %v242, %v240
  %v339 = vunpack.c.l.b16 %v115
  %v340 = vunpack.c.l.b16 %v116
  %v341 = vunpack.c.l.b16 %v117
  %v342 = vunpack.c.l.b16 %v118
  %v343 = vunpack.c.l.b16 %v119
  %v344 = vunpack.c.l.b16 %v120
  %v345 = vunpack.c.l.b16 %v121
  %v346 = vunpack.c.l.b16 %v122
  %v347 = vunpack.c.l.b16 %v123
  %v348 = vunpack.c.l.b16 %v124
  %v349 = vunpack.c.l.b16 %v125
  %v350 = vunpack.c.l.b16 %v126
  %v351 = vunpack.c.l.b16 %v127
  %v352 = vunpack.c.l.b16 %v128
  %v353 = vunpack.c.l.b16 %v129
  %v354 = vunpack.c.l.b16 %v130
  %v355 = vunpack.c.l.b16 %v131
  %v356 = vunpack.c.l.b16 %v132
  %v357 = vunpack.c.l.b16 %v133
  %v358 = vunpack.c.l.b16 %v134
  %v359 = vunpack.c.l.b16 %v135
  %v360 = vunpack.c.l.b16 %v136
  %v361 = vunpack.c.l.b16 %v137
  %v362 = vunpack.c.l.b16 %v138
  %v363 = vunpack.c.l.b16 %v139
  %v364 = vunpack.c.l.b16 %v140
  %v365 = vunpack.c.l.b16 %v141
  %v366 = vunpack.c.l.b16 %v142
  %v367 = vunpack.c.l.b16 %v143
  %v368 = vunpack.c.l.b16 %v144
  %v369 = vunpack.c.l.b16 %v145
  %v370 = vunpack.c.l.b16 %v146
  %v371 = vpack.c.b16 %v340, %v339
  %v372 = vpack.c.b16 %v342, %v341
  %v373 = vpack.c.b16 %v344, %v343
  %v374 = vpack.c.b16 %v346, %v345
  %v375 = vpack.c.b16 %v348, %v347
  %v376 = vpack.c.b16 %v350, %v349
  %v377 = vpack.c.b16 %v352, %v351
  %v378 = vpack.c.b16 %v354, %v353
  %v379 = vpack.c.b16 %v356, %v355
  %v380 = vpack.c.b16 %v358, %v357
  %v381 = vpack.c.b16 %v360, %v359
  %v382 = vpack.c.b16 %v362, %v361
  %v383 = vpack.c.b16 %v364, %v363
  %v384 = vpack.c.b16 %v366, %v365
  %v385 = vpack.c.b16 %v368, %v367
  %v386 = vpack.c.b16 %v370, %v369
  %403 = vmatprep.subr.bf16.mxu0 0
  %404 = vmatpush1.bf16.msra.mxu0 %v371
  %405 = vmatprep.subr.bf16.mxu0 0
  %406 = vmatpush1.bf16.msra.mxu0 %v372
  %407 = vmatprep.subr.bf16.mxu0 0
  %408 = vmatpush1.bf16.msra.mxu0 %v373
  %409 = vmatprep.subr.bf16.mxu0 0
  %410 = vmatpush1.bf16.msra.mxu0 %v374
  %411 = vmatprep.subr.bf16.mxu0 0
  %412 = vmatpush1.bf16.msra.mxu0 %v375
  %413 = vmatprep.subr.bf16.mxu0 0
  %414 = vmatpush1.bf16.msra.mxu0 %v376
  %415 = vmatprep.subr.bf16.mxu0 0
  %416 = vmatpush1.bf16.msra.mxu0 %v377
  %417 = vmatprep.subr.bf16.mxu0 0
  %418 = vmatpush1.bf16.msra.mxu0 %v378
  %419 = vmatprep.subr.bf16.mxu0 0
  %420 = vmatpush1.bf16.msra.mxu0 %v379
  %421 = vmatprep.subr.bf16.mxu0 0
  %422 = vmatpush1.bf16.msra.mxu0 %v380
  %423 = vmatprep.subr.bf16.mxu0 0
  %424 = vmatpush1.bf16.msra.mxu0 %v381
  %425 = vmatprep.subr.bf16.mxu0 0
  %426 = vmatpush1.bf16.msra.mxu0 %v382
  %427 = vmatprep.subr.bf16.mxu0 0
  %428 = vmatpush1.bf16.msra.mxu0 %v383
  %429 = vmatprep.subr.bf16.mxu0 0
  %430 = vmatpush1.bf16.msra.mxu0 %v384
  %431 = vmatprep.subr.bf16.mxu0 0
  %432 = vmatpush1.bf16.msra.mxu0 %v385
  %433 = vmatprep.subr.bf16.mxu0 0
  %434 = vmatpush1.bf16.msra.mxu0 %v386
  %435 = vmatprep.mubr.bf16.mxu0 %v244
  %436 = vmatmul.mubr.bf16.gmra.mrb[0].mxu0 %v243
  %v437 = vpop.f32.mrb[0].mxu0
  %v438 = vadd.f32 0.0, %v437
  %v439 = vpop.f32.mrb[0].mxu0
  %v440 = vpop.f32.mrb[0].mxu0
  %v441 = vadd.f32 0.0, %v440
  %v442 = vpop.f32.mrb[0].mxu0
  %443 = vmatprep.mubr.bf16.mxu0 %v246
  %444 = vmatmul.mubr.bf16.gmra.mrb[0].mxu0 %v245
  %v445 = vpop.f32.mrb[0].mxu0
  %v446 = vadd.f32 0.0, %v445
  %v447 = vpop.f32.mrb[0].mxu0
  %v448 = vpop.f32.mrb[0].mxu0
  %v449 = vadd.f32 0.0, %v448
  %v450 = vpop.f32.mrb[0].mxu0
  %451 = vmatprep.mubr.bf16.mxu0 %v248
  %452 = vmatmul.mubr.bf16.gmra.mrb[0].mxu0 %v247
  %v453 = vpop.f32.mrb[0].mxu0
  %v454 = vadd.f32 0.0, %v453
  %v455 = vpop.f32.mrb[0].mxu0
  %v456 = vpop.f32.mrb[0].mxu0
  %v457 = vadd.f32 0.0, %v456
  %v458 = vpop.f32.mrb[0].mxu0
  %459 = vmatprep.mubr.bf16.mxu0 %v250
  %460 = vmatmul.mubr.bf16.gmra.mrb[0].mxu0 %v249
  %v461 = vpop.f32.mrb[0].mxu0
  %v462 = vadd.f32 0.0, %v461
  %v463 = vpop.f32.mrb[0].mxu0
  %v464 = vpop.f32.mrb[0].mxu0
  %v465 = vadd.f32 0.0, %v464
  %v466 = vpop.f32.mrb[0].mxu0
  %467 = vmatprep.mubr.bf16.mxu0 %v252
  %468 = vmatmul.mubr.bf16.gmra.mrb[0].mxu0 %v251
  %v469 = vpop.f32.mrb[0].mxu0
  %v470 = vadd.f32 0.0, %v469
  %v471 = vpop.f32.mrb[0].mxu0
  %v472 = vpop.f32.mrb[0].mxu0
  %v473 = vadd.f32 0.0, %v472
  %v474 = vpop.f32.mrb[0].mxu0
  %475 = vmatprep.mubr.bf16.mxu0 %v254
  %476 = vmatmul.mubr.bf16.gmra.mrb[0].mxu0 %v253
  %v477 = vpop.f32.mrb[0].mxu0
  %v478 = vadd.f32 0.0, %v477
  %v479 = vpop.f32.mrb[0].mxu0
  %v480 = vpop.f32.mrb[0].mxu0
  %v481 = vadd.f32 0.0, %v480
  %v482 = vpop.f32.mrb[0].mxu0
  %483 = vmatprep.mubr.bf16.mxu0 %v256
  %484 = vmatmul.mubr.bf16.gmra.mrb[0].mxu0 %v255
  %v485 = vpop.f32.mrb[0].mxu0
  %v486 = vadd.f32 0.0, %v485
  %v487 = vpop.f32.mrb[0].mxu0
  %v488 = vpop.f32.mrb[0].mxu0
  %v489 = vadd.f32 0.0, %v488
  %v490 = vpop.f32.mrb[0].mxu0
  %491 = vmatprep.mubr.bf16.mxu0 %v258
  %492 = vmatmul.mubr.bf16.gmra.mrb[0].mxu0 %v257
  %v493 = vpop.f32.mrb[0].mxu0
  %v494 = vadd.f32 0.0, %v493
  %v495 = vpop.f32.mrb[0].mxu0
  %v496 = vpop.f32.mrb[0].mxu0
  %v497 = vadd.f32 0.0, %v496
  %v498 = vpop.f32.mrb[0].mxu0
  %499 = vmatprep.mubr.bf16.mxu0 %v260
  %500 = vmatmul.mubr.bf16.gmra.mrb[0].mxu0 %v259
  %v501 = vpop.f32.mrb[0].mxu0
  %v502 = vadd.f32 0.0, %v501
  %v503 = vpop.f32.mrb[0].mxu0
  %v504 = vpop.f32.mrb[0].mxu0
  %v505 = vadd.f32 0.0, %v504
  %v506 = vpop.f32.mrb[0].mxu0
  %507 = vmatprep.mubr.bf16.mxu0 %v262
  %508 = vmatmul.mubr.bf16.gmra.mrb[0].mxu0 %v261
  %v509 = vpop.f32.mrb[0].mxu0
  %v510 = vadd.f32 0.0, %v509
  %v511 = vpop.f32.mrb[0].mxu0
  %v512 = vpop.f32.mrb[0].mxu0
  %v513 = vadd.f32 0.0, %v512
  %v514 = vpop.f32.mrb[0].mxu0
  %515 = vmatprep.mubr.bf16.mxu0 %v264
  %516 = vmatmul.mubr.bf16.gmra.mrb[0].mxu0 %v263
  %v517 = vpop.f32.mrb[0].mxu0
  %v518 = vadd.f32 0.0, %v517
  %v519 = vpop.f32.mrb[0].mxu0
  %v520 = vpop.f32.mrb[0].mxu0
  %v521 = vadd.f32 0.0, %v520
  %v522 = vpop.f32.mrb[0].mxu0
  %523 = vmatprep.mubr.bf16.mxu0 %v266
  %524 = vmatmul.mubr.bf16.gmra.mrb[0].mxu0 %v265
  %v525 = vpop.f32.mrb[0].mxu0
  %v526 = vadd.f32 0.0, %v525
  %v527 = vpop.f32.mrb[0].mxu0
  %v528 = vpop.f32.mrb[0].mxu0
  %v529 = vadd.f32 0.0, %v528
  %v530 = vpop.f32.mrb[0].mxu0
  %531 = vmatprep.mubr.bf16.mxu0 %v268
  %532 = vmatmul.mubr.bf16.gmra.mrb[0].mxu0 %v267
  %v533 = vpop.f32.mrb[0].mxu0
  %v534 = vadd.f32 0.0, %v533
  %v535 = vpop.f32.mrb[0].mxu0
  %v536 = vpop.f32.mrb[0].mxu0
  %v537 = vadd.f32 0.0, %v536
  %v538 = vpop.f32.mrb[0].mxu0
  %539 = vmatprep.mubr.bf16.mxu0 %v270
  %540 = vmatmul.mubr.bf16.gmra.mrb[0].mxu0 %v269
  %v541 = vpop.f32.mrb[0].mxu0
  %v542 = vadd.f32 0.0, %v541
  %v543 = vpop.f32.mrb[0].mxu0
  %v544 = vpop.f32.mrb[0].mxu0
  %v545 = vadd.f32 0.0, %v544
  %v546 = vpop.f32.mrb[0].mxu0
  %547 = vmatprep.mubr.bf16.mxu0 %v272
  %548 = vmatmul.mubr.bf16.gmra.mrb[0].mxu0 %v271
  %v549 = vpop.f32.mrb[0].mxu0
  %v550 = vadd.f32 0.0, %v549
  %v551 = vpop.f32.mrb[0].mxu0
  %v552 = vpop.f32.mrb[0].mxu0
  %v553 = vadd.f32 0.0, %v552
  %v554 = vpop.f32.mrb[0].mxu0
  %555 = vmatprep.mubr.bf16.mxu0 %v274
  %556 = vmatmul.mubr.bf16.gmra.mrb[0].mxu0 %v273
  %v557 = vpop.f32.mrb[0].mxu0
  %v558 = vadd.f32 0.0, %v557
  %v559 = vpop.f32.mrb[0].mxu0
  %v560 = vpop.f32.mrb[0].mxu0
  %v561 = vadd.f32 0.0, %v560
  %v562 = vpop.f32.mrb[0].mxu0
  %563 = vdwg.mxu0
  %v564 = vadd.f32 %v51, %v438
  %v565 = vadd.f32 %v52, %v441
  %v566 = vadd.f32 %v53, %v446
  %v567 = vadd.f32 %v54, %v449
  %v568 = vadd.f32 %v55, %v454
  %v569 = vadd.f32 %v56, %v457
  %v570 = vadd.f32 %v57, %v462
  %v571 = vadd.f32 %v58, %v465
  %v572 = vadd.f32 %v59, %v470
  %v573 = vadd.f32 %v60, %v473
  %v574 = vadd.f32 %v61, %v478
  %v575 = vadd.f32 %v62, %v481
  %v576 = vadd.f32 %v63, %v486
  %v577 = vadd.f32 %v64, %v489
  %v578 = vadd.f32 %v65, %v494
  %v579 = vadd.f32 %v66, %v497
  %v580 = vadd.f32 %v67, %v502
  %v581 = vadd.f32 %v68, %v505
  %v582 = vadd.f32 %v69, %v510
  %v583 = vadd.f32 %v70, %v513
  %v584 = vadd.f32 %v71, %v518
  %v585 = vadd.f32 %v72, %v521
  %v586 = vadd.f32 %v73, %v526
  %v587 = vadd.f32 %v74, %v529
  %v588 = vadd.f32 %v75, %v534
  %v589 = vadd.f32 %v76, %v537
  %v590 = vadd.f32 %v77, %v542
  %v591 = vadd.f32 %v78, %v545
  %v592 = vadd.f32 %v79, %v550
  %v593 = vadd.f32 %v80, %v553
  %v594 = vadd.f32 %v81, %v558
  %v595 = vadd.f32 %v82, %v561
  %596 = vst [vmem:[#allocation2] sm:$0xff] %v564
  %597 = vst [vmem:[#allocation2 + $0x8] sm:$0xff] %v565
  %598 = vst [vmem:[#allocation2 + $0x10] sm:$0xff] %v566
  %599 = vst [vmem:[#allocation2 + $0x18] sm:$0xff] %v567
  %600 = vst [vmem:[#allocation2 + $0x20] sm:$0xff] %v568
  %601 = vst [vmem:[#allocation2 + $0x28] sm:$0xff] %v569
  %602 = vst [vmem:[#allocation2 + $0x30] sm:$0xff] %v570
  %603 = vst [vmem:[#allocation2 + $0x38] sm:$0xff] %v571
  %604 = vst [vmem:[#allocation2 + $0x40] sm:$0xff] %v572
  %605 = vst [vmem:[#allocation2 + $0x48] sm:$0xff] %v573
  %606 = vst [vmem:[#allocation2 + $0x50] sm:$0xff] %v574
  %607 = vst [vmem:[#allocation2 + $0x58] sm:$0xff] %v575
  %608 = vst [vmem:[#allocation2 + $0x60] sm:$0xff] %v576
  %609 = vst [vmem:[#allocation2 + $0x68] sm:$0xff] %v577
  %610 = vst [vmem:[#allocation2 + $0x70] sm:$0xff] %v578
  %611 = vst [vmem:[#allocation2 + $0x78] sm:$0xff] %v579
  %612 = vst [vmem:[#allocation2 + $0x80] sm:$0xff] %v580
  %613 = vst [vmem:[#allocation2 + $0x88] sm:$0xff] %v581
  %614 = vst [vmem:[#allocation2 + $0x90] sm:$0xff] %v582
  %615 = vst [vmem:[#allocation2 + $0x98] sm:$0xff] %v583
  %616 = vst [vmem:[#allocation2 + $0xa0] sm:$0xff] %v584
  %617 = vst [vmem:[#allocation2 + $0xa8] sm:$0xff] %v585
  %618 = vst [vmem:[#allocation2 + $0xb0] sm:$0xff] %v586
  %619 = vst [vmem:[#allocation2 + $0xb8] sm:$0xff] %v587
  %620 = vst [vmem:[#allocation2 + $0xc0] sm:$0xff] %v588
  %621 = vst [vmem:[#allocation2 + $0xc8] sm:$0xff] %v589
  %622 = vst [vmem:[#allocation2 + $0xd0] sm:$0xff] %v590
  %623 = vst [vmem:[#allocation2 + $0xd8] sm:$0xff] %v591
  %624 = vst [vmem:[#allocation2 + $0xe0] sm:$0xff] %v592
  %625 = vst [vmem:[#allocation2 + $0xe8] sm:$0xff] %v593
  %626 = vst [vmem:[#allocation2 + $0xf0] sm:$0xff] %v594
  %627 = vst [vmem:[#allocation2 + $0xf8] sm:$0xff] %v595
  // Predicated region
  $region14: #{gin_edge_aggregator.3} parent=0 // pred_check
    %p628 = pneg %p15
  $region15: #{gin_edge_aggregator.3} parent=0 // pred_check_branch
    %630 = sbr.rel (%p628) target = $region17
  $region16: #{gin_edge_aggregator.3} parent=0 // pred_region
    %v631 = vld [vmem:[#allocation2] sm:$0xff]
    %v632 = vld [vmem:[#allocation2 + $0x8] sm:$0xff]
    %v633 = vld [vmem:[#allocation2 + $0x10] sm:$0xff]
    %v634 = vld [vmem:[#allocation2 + $0x18] sm:$0xff]
    %v635 = vld [vmem:[#allocation2 + $0x20] sm:$0xff]
    %v636 = vld [vmem:[#allocation2 + $0x28] sm:$0xff]
    %v637 = vld [vmem:[#allocation2 + $0x30] sm:$0xff]
    %v638 = vld [vmem:[#allocation2 + $0x38] sm:$0xff]
    %v639 = vld [vmem:[#allocation2 + $0x40] sm:$0xff]
    %v640 = vld [vmem:[#allocation2 + $0x48] sm:$0xff]
    %v641 = vld [vmem:[#allocation2 + $0x50] sm:$0xff]
    %v642 = vld [vmem:[#allocation2 + $0x58] sm:$0xff]
    %v643 = vld [vmem:[#allocation2 + $0x60] sm:$0xff]
    %v644 = vld [vmem:[#allocation2 + $0x68] sm:$0xff]
    %v645 = vld [vmem:[#allocation2 + $0x70] sm:$0xff]
    %v646 = vld [vmem:[#allocation2 + $0x78] sm:$0xff]
    %v647 = vld [vmem:[#allocation2 + $0x80] sm:$0xff]
    %v648 = vld [vmem:[#allocation2 + $0x88] sm:$0xff]
    %v649 = vld [vmem:[#allocation2 + $0x90] sm:$0xff]
    %v650 = vld [vmem:[#allocation2 + $0x98] sm:$0xff]
    %v651 = vld [vmem:[#allocation2 + $0xa0] sm:$0xff]
    %v652 = vld [vmem:[#allocation2 + $0xa8] sm:$0xff]
    %v653 = vld [vmem:[#allocation2 + $0xb0] sm:$0xff]
    %v654 = vld [vmem:[#allocation2 + $0xb8] sm:$0xff]
    %v655 = vld [vmem:[#allocation2 + $0xc0] sm:$0xff]
    %v656 = vld [vmem:[#allocation2 + $0xc8] sm:$0xff]
    %v657 = vld [vmem:[#allocation2 + $0xd0] sm:$0xff]
    %v658 = vld [vmem:[#allocation2 + $0xd8] sm:$0xff]
    %v659 = vld [vmem:[#allocation2 + $0xe0] sm:$0xff]
    %v660 = vld [vmem:[#allocation2 + $0xe8] sm:$0xff]
    %v661 = vld [vmem:[#allocation2 + $0xf0] sm:$0xff]
    %v662 = vld [vmem:[#allocation2 + $0xf8] sm:$0xff]
    %v663 = vpack.c.bf16 %v632, %v631
    %v664 = vpack.c.bf16 %v634, %v633
    %v665 = vpack.c.bf16 %v636, %v635
    %v666 = vpack.c.bf16 %v638, %v637
    %v667 = vpack.c.bf16 %v640, %v639
    %v668 = vpack.c.bf16 %v642, %v641
    %v669 = vpack.c.bf16 %v644, %v643
    %v670 = vpack.c.bf16 %v646, %v645
    %v671 = vpack.c.bf16 %v648, %v647
    %v672 = vpack.c.bf16 %v650, %v649
    %v673 = vpack.c.bf16 %v652, %v651
    %v674 = vpack.c.bf16 %v654, %v653
    %v675 = vpack.c.bf16 %v656, %v655
    %v676 = vpack.c.bf16 %v658, %v657
    %v677 = vpack.c.bf16 %v660, %v659
    %v678 = vpack.c.bf16 %v662, %v661
    %v695 = vunpack.c.l.b16 %v663
    %v696 = vunpack.c.h.b16 %v663
    %v697 = vunpack.c.l.b16 %v664
    %v698 = vunpack.c.h.b16 %v664
    %v699 = vunpack.c.l.b16 %v665
    %v700 = vunpack.c.h.b16 %v665
    %v701 = vunpack.c.l.b16 %v666
    %v702 = vunpack.c.h.b16 %v666
    %v703 = vunpack.c.l.b16 %v667
    %v704 = vunpack.c.h.b16 %v667
    %v705 = vunpack.c.l.b16 %v668
    %v706 = vunpack.c.h.b16 %v668
    %v707 = vunpack.c.l.b16 %v669
    %v708 = vunpack.c.h.b16 %v669
    %v709 = vunpack.c.l.b16 %v670
    %v710 = vunpack.c.h.b16 %v670
    %v711 = vunpack.c.l.b16 %v671
    %v712 = vunpack.c.h.b16 %v671
    %v713 = vunpack.c.l.b16 %v672
    %v714 = vunpack.c.h.b16 %v672
    %v715 = vunpack.c.l.b16 %v673
    %v716 = vunpack.c.h.b16 %v673
    %v717 = vunpack.c.l.b16 %v674
    %v718 = vunpack.c.h.b16 %v674
    %v719 = vunpack.c.l.b16 %v675
    %v720 = vunpack.c.h.b16 %v675
    %v721 = vunpack.c.l.b16 %v676
    %v722 = vunpack.c.h.b16 %v676
    %v723 = vunpack.c.l.b16 %v677
    %v724 = vunpack.c.h.b16 %v677
    %v725 = vunpack.c.l.b16 %v678
    %v726 = vunpack.c.h.b16 %v678
    %v727 = vpack.c.b16 %v695, %v695
    %v728 = vpack.c.b16 %v696, %v696
    %v729 = vpack.c.b16 %v697, %v697
    %v730 = vpack.c.b16 %v698, %v698
    %v731 = vpack.c.b16 %v699, %v699
    %v732 = vpack.c.b16 %v700, %v700
    %v733 = vpack.c.b16 %v701, %v701
    %v734 = vpack.c.b16 %v702, %v702
    %v735 = vpack.c.b16 %v703, %v703
    %v736 = vpack.c.b16 %v704, %v704
    %v737 = vpack.c.b16 %v705, %v705
    %v738 = vpack.c.b16 %v706, %v706
    %v739 = vpack.c.b16 %v707, %v707
    %v740 = vpack.c.b16 %v708, %v708
    %v741 = vpack.c.b16 %v709, %v709
    %v742 = vpack.c.b16 %v710, %v710
    %v743 = vpack.c.b16 %v711, %v711
    %v744 = vpack.c.b16 %v712, %v712
    %v745 = vpack.c.b16 %v713, %v713
    %v746 = vpack.c.b16 %v714, %v714
    %v747 = vpack.c.b16 %v715, %v715
    %v748 = vpack.c.b16 %v716, %v716
    %v749 = vpack.c.b16 %v717, %v717
    %v750 = vpack.c.b16 %v718, %v718
    %v751 = vpack.c.b16 %v719, %v719
    %v752 = vpack.c.b16 %v720, %v720
    %v753 = vpack.c.b16 %v721, %v721
    %v754 = vpack.c.b16 %v722, %v722
    %v755 = vpack.c.b16 %v723, %v723
    %v756 = vpack.c.b16 %v724, %v724
    %v757 = vpack.c.b16 %v725, %v725
    %v758 = vpack.c.b16 %v726, %v726
    %791 = vst [vmem:[%s2] sm:$0xf] %v727
    %792 = vst [vmem:[%s2 + $0x4] sm:$0xf] %v728
    %793 = vst [vmem:[%s2 + $0x8] sm:$0xf] %v729
    %794 = vst [vmem:[%s2 + $0xc] sm:$0xf] %v730
    %795 = vst [vmem:[%s2 + $0x10] sm:$0xf] %v731
    %796 = vst [vmem:[%s2 + $0x14] sm:$0xf] %v732
    %797 = vst [vmem:[%s2 + $0x18] sm:$0xf] %v733
    %798 = vst [vmem:[%s2 + $0x1c] sm:$0xf] %v734
    %799 = vst [vmem:[%s2 + $0x20] sm:$0xf] %v735
    %800 = vst [vmem:[%s2 + $0x24] sm:$0xf] %v736
    %801 = vst [vmem:[%s2 + $0x28] sm:$0xf] %v737
    %802 = vst [vmem:[%s2 + $0x2c] sm:$0xf] %v738
    %803 = vst [vmem:[%s2 + $0x30] sm:$0xf] %v739
    %804 = vst [vmem:[%s2 + $0x34] sm:$0xf] %v740
    %805 = vst [vmem:[%s2 + $0x38] sm:$0xf] %v741
    %806 = vst [vmem:[%s2 + $0x3c] sm:$0xf] %v742
    %807 = vst [vmem:[%s2 + $0x40] sm:$0xf] %v743
    %808 = vst [vmem:[%s2 + $0x44] sm:$0xf] %v744
    %809 = vst [vmem:[%s2 + $0x48] sm:$0xf] %v745
    %810 = vst [vmem:[%s2 + $0x4c] sm:$0xf] %v746
    %811 = vst [vmem:[%s2 + $0x50] sm:$0xf] %v747
    %812 = vst [vmem:[%s2 + $0x54] sm:$0xf] %v748
    %813 = vst [vmem:[%s2 + $0x58] sm:$0xf] %v749
    %814 = vst [vmem:[%s2 + $0x5c] sm:$0xf] %v750
    %815 = vst [vmem:[%s2 + $0x60] sm:$0xf] %v751
    %816 = vst [vmem:[%s2 + $0x64] sm:$0xf] %v752
    %817 = vst [vmem:[%s2 + $0x68] sm:$0xf] %v753
    %818 = vst [vmem:[%s2 + $0x6c] sm:$0xf] %v754
    %819 = vst [vmem:[%s2 + $0x70] sm:$0xf] %v755
    %820 = vst [vmem:[%s2 + $0x74] sm:$0xf] %v756
    %821 = vst [vmem:[%s2 + $0x78] sm:$0xf] %v757
    %822 = vst [vmem:[%s2 + $0x7c] sm:$0xf] %v758
    %v823 = vunpack.c.l.bf16 %v663
    %v824 = vunpack.c.h.bf16 %v663
    %v825 = vunpack.c.l.bf16 %v664
    %v826 = vunpack.c.h.bf16 %v664
    %v827 = vunpack.c.l.bf16 %v665
    %v828 = vunpack.c.h.bf16 %v665
    %v829 = vunpack.c.l.bf16 %v666
    %v830 = vunpack.c.h.bf16 %v666
    %v831 = vunpack.c.l.bf16 %v667
    %v832 = vunpack.c.h.bf16 %v667
    %v833 = vunpack.c.l.bf16 %v668
    %v834 = vunpack.c.h.bf16 %v668
    %v835 = vunpack.c.l.bf16 %v669
    %v836 = vunpack.c.h.bf16 %v669
    %v837 = vunpack.c.l.bf16 %v670
    %v838 = vunpack.c.h.bf16 %v670
    %v839 = vunpack.c.l.bf16 %v671
    %v840 = vunpack.c.h.bf16 %v671
    %v841 = vunpack.c.l.bf16 %v672
    %v842 = vunpack.c.h.bf16 %v672
    %v843 = vunpack.c.l.bf16 %v673
    %v844 = vunpack.c.h.bf16 %v673
    %v845 = vunpack.c.l.bf16 %v674
    %v846 = vunpack.c.h.bf16 %v674
    %v847 = vunpack.c.l.bf16 %v675
    %v848 = vunpack.c.h.bf16 %v675
    %v849 = vunpack.c.l.bf16 %v676
    %v850 = vunpack.c.h.bf16 %v676
    %v851 = vunpack.c.l.bf16 %v677
    %v852 = vunpack.c.h.bf16 %v677
    %v853 = vunpack.c.l.bf16 %v678
    %v854 = vunpack.c.h.bf16 %v678
    %v855 = vadd.f32 %v823, %v824
    %v856 = vadd.f32 %v855, %v825
    %v857 = vadd.f32 %v856, %v826
    %v858 = vadd.f32 %v857, %v827
    %v859 = vadd.f32 %v858, %v828
    %v860 = vadd.f32 %v859, %v829
    %v861 = vadd.f32 %v860, %v830
    %v862 = vadd.f32 %v861, %v831
    %v863 = vadd.f32 %v862, %v832
    %v864 = vadd.f32 %v863, %v833
    %v865 = vadd.f32 %v864, %v834
    %v866 = vadd.f32 %v865, %v835
    %v867 = vadd.f32 %v866, %v836
    %v868 = vadd.f32 %v867, %v837
    %v869 = vadd.f32 %v868, %v838
    %v870 = vadd.f32 %v869, %v839
    %v871 = vadd.f32 %v870, %v840
    %v872 = vadd.f32 %v871, %v841
    %v873 = vadd.f32 %v872, %v842
    %v874 = vadd.f32 %v873, %v843
    %v875 = vadd.f32 %v874, %v844
    %v876 = vadd.f32 %v875, %v845
    %v877 = vadd.f32 %v876, %v846
    %v878 = vadd.f32 %v877, %v847
    %v879 = vadd.f32 %v878, %v848
    %v880 = vadd.f32 %v879, %v849
    %v881 = vadd.f32 %v880, %v850
    %v882 = vadd.f32 %v881, %v851
    %v883 = vadd.f32 %v882, %v852
    %v884 = vadd.f32 %v883, %v853
    %v885 = vadd.f32 %v884, %v854
    %v886 = vrot.slane %v885, 4
    %v887 = vadd.f32 %v885, %v886
    %v888 = vrot.slane %v887, 2
    %v889 = vadd.f32 %v887, %v888
    %v890 = vrot.slane %v889, 1
    %v891 = vadd.f32 %v889, %v890
    %892 = vst [vmem:[%s3] sm:$0x1] %v891
    %v893 = vmul.f32 %v823, %v823
    %v894 = vmul.f32 %v824, %v824
    %v895 = vmul.f32 %v825, %v825
    %v896 = vmul.f32 %v826, %v826
    %v897 = vmul.f32 %v827, %v827
    %v898 = vmul.f32 %v828, %v828
    %v899 = vmul.f32 %v829, %v829
    %v900 = vmul.f32 %v830, %v830
    %v901 = vmul.f32 %v831, %v831
    %v902 = vmul.f32 %v832, %v832
    %v903 = vmul.f32 %v833, %v833
    %v904 = vmul.f32 %v834, %v834
    %v905 = vmul.f32 %v835, %v835
    %v906 = vmul.f32 %v836, %v836
    %v907 = vmul.f32 %v837, %v837
    %v908 = vmul.f32 %v838, %v838
    %v909 = vmul.f32 %v839, %v839
    %v910 = vmul.f32 %v840, %v840
    %v911 = vmul.f32 %v841, %v841
    %v912 = vmul.f32 %v842, %v842
    %v913 = vmul.f32 %v843, %v843
    %v914 = vmul.f32 %v844, %v844
    %v915 = vmul.f32 %v845, %v845
    %v916 = vmul.f32 %v846, %v846
    %v917 = vmul.f32 %v847, %v847
    %v918 = vmul.f32 %v848, %v848
    %v919 = vmul.f32 %v849, %v849
    %v920 = vmul.f32 %v850, %v850
    %v921 = vmul.f32 %v851, %v851
    %v922 = vmul.f32 %v852, %v852
    %v923 = vmul.f32 %v853, %v853
    %v924 = vmul.f32 %v854, %v854
    %v925 = vadd.f32 %v893, %v894
    %v926 = vadd.f32 %v925, %v895
    %v927 = vadd.f32 %v926, %v896
    %v928 = vadd.f32 %v927, %v897
    %v929 = vadd.f32 %v928, %v898
    %v930 = vadd.f32 %v929, %v899
    %v931 = vadd.f32 %v930, %v900
    %v932 = vadd.f32 %v931, %v901
    %v933 = vadd.f32 %v932, %v902
    %v934 = vadd.f32 %v933, %v903
    %v935 = vadd.f32 %v934, %v904
    %v936 = vadd.f32 %v935, %v905
    %v937 = vadd.f32 %v936, %v906
    %v938 = vadd.f32 %v937, %v907
    %v939 = vadd.f32 %v938, %v908
    %v940 = vadd.f32 %v939, %v909
    %v941 = vadd.f32 %v940, %v910
    %v942 = vadd.f32 %v941, %v911
    %v943 = vadd.f32 %v942, %v912
    %v944 = vadd.f32 %v943, %v913
    %v945 = vadd.f32 %v944, %v914
    %v946 = vadd.f32 %v945, %v915
    %v947 = vadd.f32 %v946, %v916
    %v948 = vadd.f32 %v947, %v917
    %v949 = vadd.f32 %v948, %v918
    %v950 = vadd.f32 %v949, %v919
    %v951 = vadd.f32 %v950, %v920
    %v952 = vadd.f32 %v951, %v921
    %v953 = vadd.f32 %v952, %v922
    %v954 = vadd.f32 %v953, %v923
    %v955 = vadd.f32 %v954, %v924
    %v956 = vrot.slane %v955, 4
    %v957 = vadd.f32 %v955, %v956
    %v958 = vrot.slane %v957, 2
    %v959 = vadd.f32 %v957, %v958
    %v960 = vrot.slane %v959, 1
    %v961 = vadd.f32 %v959, %v960
    %962 = vst [vmem:[%s4] sm:$0x1] %v961
  $region17: #{gin_edge_aggregator.3} parent=0 // pred_fallthru
    _
  // Predicated region
  $region18: #{gin_edge_aggregator.3} parent=0 // pred_check
    _
  $region19: #{gin_edge_aggregator.3} parent=0 // pred_check_branch
    %964 = sbr.rel (0) target = $region21
  $region20: #{gin_edge_aggregator.3} parent=0 // pred_region
    _
  $region21: #{gin_edge_aggregator.3} parent=0 // pred_fallthru
    _
  // Predicated region
  $region22: #{gin_edge_aggregator.3} parent=0 // pred_check
    _
  $region23: #{gin_edge_aggregator.3} parent=0 // pred_check_branch
    %966 = sbr.rel (0) target = $region25
  $region24: #{gin_edge_aggregator.3} parent=0 // pred_region
    _
  $region25: #{gin_edge_aggregator.3} parent=0 // pred_fallthru
    _
  // Predicated region
  $region26: #{gin_edge_aggregator.3} parent=0 // pred_check
    _
  $region27: #{gin_edge_aggregator.3} parent=0 // pred_check_branch
    %968 = sbr.rel (0) target = $region29
  $region28: #{gin_edge_aggregator.3} parent=0 // pred_region
    _
  $region29: #{gin_edge_aggregator.3} parent=0 // pred_fallthru
    _
  // Predicated region
  $region30: #{gin_edge_aggregator.3} parent=0 // pred_check
    _
  $region31: #{gin_edge_aggregator.3} parent=0 // pred_check_branch
    %970 = sbr.rel (0) target = $region33
  $region32: #{gin_edge_aggregator.3} parent=0 // pred_region
    _
  $region33: #{gin_edge_aggregator.3} parent=0 // pred_fallthru
    _
  // Predicated region
  $region34: #{gin_edge_aggregator.3} parent=0 // pred_check
    _
  $region35: #{gin_edge_aggregator.3} parent=0 // pred_check_branch
    %972 = sbr.rel (0) target = $region37
  $region36: #{gin_edge_aggregator.3} parent=0 // pred_region
    _
  $region37: #{gin_edge_aggregator.3} parent=0 // pred_fallthru
    _
  // Predicated region
  $region38: #{gin_edge_aggregator.3} parent=0 // pred_check
    _
  $region39: #{gin_edge_aggregator.3} parent=0 // pred_check_branch
    %974 = sbr.rel (0) target = $region41
  $region40: #{gin_edge_aggregator.3} parent=0 // pred_region
    _
  $region41: #{gin_edge_aggregator.3} parent=0 // pred_fallthru
    _

// kernel: gin_edge_aggregator.4
$region0: #{gin_edge_aggregator.4}
  #allocation0 [shape = 'u32[]', space=smem, size = 0x4, offset = 0x4, fixed_abs, tag = 'smem constant byte address 0x4 - core index']
  #allocation1 [shape = 'u32[144,128]{1,0:T(1,128)}', space=vmem, size = 0x12000, scoped, tag = 'internal scratch']
  %s0 = inlined_call_operand.vmem [shape: bf16[256,128], index: 0, kind: input, shape index: {}]
  %s1 = inlined_call_operand.vmem [shape: f32[1,128], index: 1, kind: input, shape index: {}]
  %s2 = inlined_call_operand.vmem [shape: f32[1,128], index: 2, kind: input, shape index: {}]
  %s3 = inlined_call_operand.vmem [shape: bf16[128,128], index: 3, kind: input, shape index: {}]
  %s4 = inlined_call_operand.vmem [shape: bf16[256,128], index: 4, kind: output, shape index: {0}]
  %s5 = inlined_call_operand.vmem [shape: f32[1,128], index: 5, kind: output, shape index: {1}]
  %s6 = inlined_call_operand.vmem [shape: f32[1,128], index: 6, kind: output, shape index: {2}]
  %7 = xla_tuple %s4, %s5, %s6
  %s8 = sld [smem:[#allocation0]]
  $region50: #{gin_edge_aggregator.4} parent=0
    _
  %s10 = ssub.s32 1, %s8
  %s11 = scalar_select 0, %s10, %s8
  // Predicated region
  $region2: #{gin_edge_aggregator.4} parent=0 // pred_check
    _
  $region3: #{gin_edge_aggregator.4} parent=0 // pred_check_branch
    %13 = sbr.rel (0) target = $region5
  $region4: #{gin_edge_aggregator.4} parent=0 // pred_region
    _
  $region5: #{gin_edge_aggregator.4} parent=0 // pred_fallthru
    _
  // Predicated region
  $region6: #{gin_edge_aggregator.4} parent=0 // pred_check
    _
  $region7: #{gin_edge_aggregator.4} parent=0 // pred_check_branch
    %15 = sbr.rel (0) target = $region9
  $region8: #{gin_edge_aggregator.4} parent=0 // pred_region
    _
  $region9: #{gin_edge_aggregator.4} parent=0 // pred_fallthru
    _
  // Predicated region
  $region10: #{gin_edge_aggregator.4} parent=0 // pred_check
    _
  $region11: #{gin_edge_aggregator.4} parent=0 // pred_check_branch
    %17 = sbr.rel (0) target = $region13
  $region12: #{gin_edge_aggregator.4} parent=0 // pred_region
    _
  $region13: #{gin_edge_aggregator.4} parent=0 // pred_fallthru
    _
  // Predicated region
  $region14: #{gin_edge_aggregator.4} parent=0 // pred_check
    _
  $region15: #{gin_edge_aggregator.4} parent=0 // pred_check_branch
    %19 = sbr.rel (0) target = $region17
  $region16: #{gin_edge_aggregator.4} parent=0 // pred_region
    _
  $region17: #{gin_edge_aggregator.4} parent=0 // pred_fallthru
    _
  %v21 = vld [vmem:[%s0] sm:$0xf]
  %v22 = vld [vmem:[%s0 + $0x4] sm:$0xf]
  %v23 = vld [vmem:[%s0 + $0x8] sm:$0xf]
  %v24 = vld [vmem:[%s0 + $0xc] sm:$0xf]
  %v25 = vld [vmem:[%s0 + $0x10] sm:$0xf]
  %v26 = vld [vmem:[%s0 + $0x14] sm:$0xf]
  %v27 = vld [vmem:[%s0 + $0x18] sm:$0xf]
  %v28 = vld [vmem:[%s0 + $0x1c] sm:$0xf]
  %v29 = vld [vmem:[%s0 + $0x20] sm:$0xf]
  %v30 = vld [vmem:[%s0 + $0x24] sm:$0xf]
  %v31 = vld [vmem:[%s0 + $0x28] sm:$0xf]
  %v32 = vld [vmem:[%s0 + $0x2c] sm:$0xf]
  %v33 = vld [vmem:[%s0 + $0x30] sm:$0xf]
  %v34 = vld [vmem:[%s0 + $0x34] sm:$0xf]
  %v35 = vld [vmem:[%s0 + $0x38] sm:$0xf]
  %v36 = vld [vmem:[%s0 + $0x3c] sm:$0xf]
  %v37 = vld [vmem:[%s0 + $0x40] sm:$0xf]
  %v38 = vld [vmem:[%s0 + $0x44] sm:$0xf]
  %v39 = vld [vmem:[%s0 + $0x48] sm:$0xf]
  %v40 = vld [vmem:[%s0 + $0x4c] sm:$0xf]
  %v41 = vld [vmem:[%s0 + $0x50] sm:$0xf]
  %v42 = vld [vmem:[%s0 + $0x54] sm:$0xf]
  %v43 = vld [vmem:[%s0 + $0x58] sm:$0xf]
  %v44 = vld [vmem:[%s0 + $0x5c] sm:$0xf]
  %v45 = vld [vmem:[%s0 + $0x60] sm:$0xf]
  %v46 = vld [vmem:[%s0 + $0x64] sm:$0xf]
  %v47 = vld [vmem:[%s0 + $0x68] sm:$0xf]
  %v48 = vld [vmem:[%s0 + $0x6c] sm:$0xf]
  %v49 = vld [vmem:[%s0 + $0x70] sm:$0xf]
  %v50 = vld [vmem:[%s0 + $0x74] sm:$0xf]
  %v51 = vld [vmem:[%s0 + $0x78] sm:$0xf]
  %v52 = vld [vmem:[%s0 + $0x7c] sm:$0xf]
  %v53 = vunpack.c.l.bf16 %v21
  %v54 = vunpack.c.l.bf16 %v22
  %v55 = vunpack.c.l.bf16 %v23
  %v56 = vunpack.c.l.bf16 %v24
  %v57 = vunpack.c.l.bf16 %v25
  %v58 = vunpack.c.l.bf16 %v26
  %v59 = vunpack.c.l.bf16 %v27
  %v60 = vunpack.c.l.bf16 %v28
  %v61 = vunpack.c.l.bf16 %v29
  %v62 = vunpack.c.l.bf16 %v30
  %v63 = vunpack.c.l.bf16 %v31
  %v64 = vunpack.c.l.bf16 %v32
  %v65 = vunpack.c.l.bf16 %v33
  %v66 = vunpack.c.l.bf16 %v34
  %v67 = vunpack.c.l.bf16 %v35
  %v68 = vunpack.c.l.bf16 %v36
  %v69 = vunpack.c.l.bf16 %v37
  %v70 = vunpack.c.l.bf16 %v38
  %v71 = vunpack.c.l.bf16 %v39
  %v72 = vunpack.c.l.bf16 %v40
  %v73 = vunpack.c.l.bf16 %v41
  %v74 = vunpack.c.l.bf16 %v42
  %v75 = vunpack.c.l.bf16 %v43
  %v76 = vunpack.c.l.bf16 %v44
  %v77 = vunpack.c.l.bf16 %v45
  %v78 = vunpack.c.l.bf16 %v46
  %v79 = vunpack.c.l.bf16 %v47
  %v80 = vunpack.c.l.bf16 %v48
  %v81 = vunpack.c.l.bf16 %v49
  %v82 = vunpack.c.l.bf16 %v50
  %v83 = vunpack.c.l.bf16 %v51
  %v84 = vunpack.c.l.bf16 %v52
  %v85 = vld [vmem:[%s1] sm:$0x1]
  %v87 = vlaneseq
  %v88 = vshrl.u32 %v87, 7
  %v89 = vsub.s32 0, %v88
  %v90 = vrot.slane %v85, %v89
  %v92 = vmul.f32 %v53, %v90
  %v93 = vmul.f32 %v54, %v90
  %v94 = vmul.f32 %v55, %v90
  %v95 = vmul.f32 %v56, %v90
  %v96 = vmul.f32 %v57, %v90
  %v97 = vmul.f32 %v58, %v90
  %v98 = vmul.f32 %v59, %v90
  %v99 = vmul.f32 %v60, %v90
  %v100 = vmul.f32 %v61, %v90
  %v101 = vmul.f32 %v62, %v90
  %v102 = vmul.f32 %v63, %v90
  %v103 = vmul.f32 %v64, %v90
  %v104 = vmul.f32 %v65, %v90
  %v105 = vmul.f32 %v66, %v90
  %v106 = vmul.f32 %v67, %v90
  %v107 = vmul.f32 %v68, %v90
  %v108 = vmul.f32 %v69, %v90
  %v109 = vmul.f32 %v70, %v90
  %v110 = vmul.f32 %v71, %v90
  %v111 = vmul.f32 %v72, %v90
  %v112 = vmul.f32 %v73, %v90
  %v113 = vmul.f32 %v74, %v90
  %v114 = vmul.f32 %v75, %v90
  %v115 = vmul.f32 %v76, %v90
  %v116 = vmul.f32 %v77, %v90
  %v117 = vmul.f32 %v78, %v90
  %v118 = vmul.f32 %v79, %v90
  %v119 = vmul.f32 %v80, %v90
  %v120 = vmul.f32 %v81, %v90
  %v121 = vmul.f32 %v82, %v90
  %v122 = vmul.f32 %v83, %v90
  %v123 = vmul.f32 %v84, %v90
  %v124 = vld [vmem:[%s2] sm:$0x1]
  %v126 = vlaneseq
  %v127 = vshrl.u32 %v126, 7
  %v128 = vsub.s32 0, %v127
  %v129 = vrot.slane %v124, %v128
  %v131 = vadd.f32 %v92, %v129
  %v132 = vadd.f32 %v93, %v129
  %v133 = vadd.f32 %v94, %v129
  %v134 = vadd.f32 %v95, %v129
  %v135 = vadd.f32 %v96, %v129
  %v136 = vadd.f32 %v97, %v129
  %v137 = vadd.f32 %v98, %v129
  %v138 = vadd.f32 %v99, %v129
  %v139 = vadd.f32 %v100, %v129
  %v140 = vadd.f32 %v101, %v129
  %v141 = vadd.f32 %v102, %v129
  %v142 = vadd.f32 %v103, %v129
  %v143 = vadd.f32 %v104, %v129
  %v144 = vadd.f32 %v105, %v129
  %v145 = vadd.f32 %v106, %v129
  %v146 = vadd.f32 %v107, %v129
  %v147 = vadd.f32 %v108, %v129
  %v148 = vadd.f32 %v109, %v129
  %v149 = vadd.f32 %v110, %v129
  %v150 = vadd.f32 %v111, %v129
  %v151 = vadd.f32 %v112, %v129
  %v152 = vadd.f32 %v113, %v129
  %v153 = vadd.f32 %v114, %v129
  %v154 = vadd.f32 %v115, %v129
  %v155 = vadd.f32 %v116, %v129
  %v156 = vadd.f32 %v117, %v129
  %v157 = vadd.f32 %v118, %v129
  %v158 = vadd.f32 %v119, %v129
  %v159 = vadd.f32 %v120, %v129
  %v160 = vadd.f32 %v121, %v129
  %v161 = vadd.f32 %v122, %v129
  %v162 = vadd.f32 %v123, %v129
  %v163 = vmax.f32 %v131, 0.0
  %v164 = vmax.f32 %v132, 0.0
  %v165 = vmax.f32 %v133, 0.0
  %v166 = vmax.f32 %v134, 0.0
  %v167 = vmax.f32 %v135, 0.0
  %v168 = vmax.f32 %v136, 0.0
  %v169 = vmax.f32 %v137, 0.0
  %v170 = vmax.f32 %v138, 0.0
  %v171 = vmax.f32 %v139, 0.0
  %v172 = vmax.f32 %v140, 0.0
  %v173 = vmax.f32 %v141, 0.0
  %v174 = vmax.f32 %v142, 0.0
  %v175 = vmax.f32 %v143, 0.0
  %v176 = vmax.f32 %v144, 0.0
  %v177 = vmax.f32 %v145, 0.0
  %v178 = vmax.f32 %v146, 0.0
  %v179 = vmax.f32 %v147, 0.0
  %v180 = vmax.f32 %v148, 0.0
  %v181 = vmax.f32 %v149, 0.0
  %v182 = vmax.f32 %v150, 0.0
  %v183 = vmax.f32 %v151, 0.0
  %v184 = vmax.f32 %v152, 0.0
  %v185 = vmax.f32 %v153, 0.0
  %v186 = vmax.f32 %v154, 0.0
  %v187 = vmax.f32 %v155, 0.0
  %v188 = vmax.f32 %v156, 0.0
  %v189 = vmax.f32 %v157, 0.0
  %v190 = vmax.f32 %v158, 0.0
  %v191 = vmax.f32 %v159, 0.0
  %v192 = vmax.f32 %v160, 0.0
  %v193 = vmax.f32 %v161, 0.0
  %v194 = vmax.f32 %v162, 0.0
  %v195 = vld [vmem:[%s3] sm:$0xf]
  %v196 = vld [vmem:[%s3 + $0x4] sm:$0xf]
  %v197 = vld [vmem:[%s3 + $0x8] sm:$0xf]
  %v198 = vld [vmem:[%s3 + $0xc] sm:$0xf]
  %v199 = vld [vmem:[%s3 + $0x10] sm:$0xf]
  %v200 = vld [vmem:[%s3 + $0x14] sm:$0xf]
  %v201 = vld [vmem:[%s3 + $0x18] sm:$0xf]
  %v202 = vld [vmem:[%s3 + $0x1c] sm:$0xf]
  %v203 = vld [vmem:[%s3 + $0x20] sm:$0xf]
  %v204 = vld [vmem:[%s3 + $0x24] sm:$0xf]
  %v205 = vld [vmem:[%s3 + $0x28] sm:$0xf]
  %v206 = vld [vmem:[%s3 + $0x2c] sm:$0xf]
  %v207 = vld [vmem:[%s3 + $0x30] sm:$0xf]
  %v208 = vld [vmem:[%s3 + $0x34] sm:$0xf]
  %v209 = vld [vmem:[%s3 + $0x38] sm:$0xf]
  %v210 = vld [vmem:[%s3 + $0x3c] sm:$0xf]
  %p211 = scmp.lt.s32.totalorder 0, 0
  // Predicated region
  $region18: #{gin_edge_aggregator.4} parent=0 // pred_check
    %p212 = pneg %p211
  $region19: #{gin_edge_aggregator.4} parent=0 // pred_check_branch
    %214 = sbr.rel (%p212) target = $region21
  $region20: #{gin_edge_aggregator.4} parent=0 // pred_region
    %v215 = vpack.c.bf16 %v164, %v163
    %v216 = vpack.c.bf16 %v166, %v165
    %v217 = vpack.c.bf16 %v168, %v167
    %v218 = vpack.c.bf16 %v170, %v169
    %v219 = vpack.c.bf16 %v172, %v171
    %v220 = vpack.c.bf16 %v174, %v173
    %v221 = vpack.c.bf16 %v176, %v175
    %v222 = vpack.c.bf16 %v178, %v177
    %v223 = vpack.c.bf16 %v180, %v179
    %v224 = vpack.c.bf16 %v182, %v181
    %v225 = vpack.c.bf16 %v184, %v183
    %v226 = vpack.c.bf16 %v186, %v185
    %v227 = vpack.c.bf16 %v188, %v187
    %v228 = vpack.c.bf16 %v190, %v189
    %v229 = vpack.c.bf16 %v192, %v191
    %v230 = vpack.c.bf16 %v194, %v193
    %v247 = vunpack.c.l.b16 %v195
    %v248 = vunpack.c.l.b16 %v196
    %v249 = vunpack.c.l.b16 %v197
    %v250 = vunpack.c.l.b16 %v198
    %v251 = vunpack.c.l.b16 %v199
    %v252 = vunpack.c.l.b16 %v200
    %v253 = vunpack.c.l.b16 %v201
    %v254 = vunpack.c.l.b16 %v202
    %v255 = vunpack.c.l.b16 %v203
    %v256 = vunpack.c.l.b16 %v204
    %v257 = vunpack.c.l.b16 %v205
    %v258 = vunpack.c.l.b16 %v206
    %v259 = vunpack.c.l.b16 %v207
    %v260 = vunpack.c.l.b16 %v208
    %v261 = vunpack.c.l.b16 %v209
    %v262 = vunpack.c.l.b16 %v210
    %v263 = vpack.c.b16 %v248, %v247
    %v264 = vpack.c.b16 %v250, %v249
    %v265 = vpack.c.b16 %v252, %v251
    %v266 = vpack.c.b16 %v254, %v253
    %v267 = vpack.c.b16 %v256, %v255
    %v268 = vpack.c.b16 %v258, %v257
    %v269 = vpack.c.b16 %v260, %v259
    %v270 = vpack.c.b16 %v262, %v261
    %279 = vmatprep.subr.bf16.mxu0 0
    %280 = vmatpush1.bf16.msra.mxu0 %v263
    %281 = vmatprep.subr.bf16.mxu0 0
    %282 = vmatpush1.bf16.msra.mxu0 %v264
    %283 = vmatprep.subr.bf16.mxu0 0
    %284 = vmatpush1.bf16.msra.mxu0 %v265
    %285 = vmatprep.subr.bf16.mxu0 0
    %286 = vmatpush1.bf16.msra.mxu0 %v266
    %287 = vmatprep.subr.bf16.mxu0 0
    %288 = vmatpush1.bf16.msra.mxu0 %v267
    %289 = vmatprep.subr.bf16.mxu0 0
    %290 = vmatpush1.bf16.msra.mxu0 %v268
    %291 = vmatprep.subr.bf16.mxu0 0
    %292 = vmatpush1.bf16.msra.mxu0 %v269
    %293 = vmatprep.subr.bf16.mxu0 0
    %294 = vmatpush1.bf16.msra.mxu0 %v270
    %295 = vmatprep.subr.bf16.mxu0 0
    %296 = vmatpush1.bf16.msra.mxu0 0
    %297 = vmatprep.subr.bf16.mxu0 0
    %298 = vmatpush1.bf16.msra.mxu0 0
    %299 = vmatprep.subr.bf16.mxu0 0
    %300 = vmatpush1.bf16.msra.mxu0 0
    %301 = vmatprep.subr.bf16.mxu0 0
    %302 = vmatpush1.bf16.msra.mxu0 0
    %303 = vmatprep.subr.bf16.mxu0 0
    %304 = vmatpush1.bf16.msra.mxu0 0
    %305 = vmatprep.subr.bf16.mxu0 0
    %306 = vmatpush1.bf16.msra.mxu0 0
    %307 = vmatprep.subr.bf16.mxu0 0
    %308 = vmatpush1.bf16.msra.mxu0 0
    %309 = vmatprep.subr.bf16.mxu0 0
    %310 = vmatpush1.bf16.msra.mxu0 0
    %311 = vmatprep.mubr.bf16.mxu0 0
    %312 = vmatmul.mubr.bf16.gmra.mrb[0].mxu0 %v215
    %v313 = vpop.f32.mrb[0].mxu0
    %v314 = vadd.f32 0.0, %v313
    %v315 = vpop.f32.mrb[0].mxu0
    %v316 = vpop.f32.mrb[0].mxu0
    %v317 = vadd.f32 0.0, %v316
    %v318 = vpop.f32.mrb[0].mxu0
    %319 = vmatprep.mubr.bf16.mxu0 0
    %320 = vmatmul.mubr.bf16.gmra.mrb[0].mxu0 %v216
    %v321 = vpop.f32.mrb[0].mxu0
    %v322 = vadd.f32 0.0, %v321
    %v323 = vpop.f32.mrb[0].mxu0
    %v324 = vpop.f32.mrb[0].mxu0
    %v325 = vadd.f32 0.0, %v324
    %v326 = vpop.f32.mrb[0].mxu0
    %327 = vmatprep.mubr.bf16.mxu0 0
    %328 = vmatmul.mubr.bf16.gmra.mrb[0].mxu0 %v217
    %v329 = vpop.f32.mrb[0].mxu0
    %v330 = vadd.f32 0.0, %v329
    %v331 = vpop.f32.mrb[0].mxu0
    %v332 = vpop.f32.mrb[0].mxu0
    %v333 = vadd.f32 0.0, %v332
    %v334 = vpop.f32.mrb[0].mxu0
    %335 = vmatprep.mubr.bf16.mxu0 0
    %336 = vmatmul.mubr.bf16.gmra.mrb[0].mxu0 %v218
    %v337 = vpop.f32.mrb[0].mxu0
    %v338 = vadd.f32 0.0, %v337
    %v339 = vpop.f32.mrb[0].mxu0
    %v340 = vpop.f32.mrb[0].mxu0
    %v341 = vadd.f32 0.0, %v340
    %v342 = vpop.f32.mrb[0].mxu0
    %343 = vmatprep.mubr.bf16.mxu0 0
    %344 = vmatmul.mubr.bf16.gmra.mrb[0].mxu0 %v219
    %v345 = vpop.f32.mrb[0].mxu0
    %v346 = vadd.f32 0.0, %v345
    %v347 = vpop.f32.mrb[0].mxu0
    %v348 = vpop.f32.mrb[0].mxu0
    %v349 = vadd.f32 0.0, %v348
    %v350 = vpop.f32.mrb[0].mxu0
    %351 = vmatprep.mubr.bf16.mxu0 0
    %352 = vmatmul.mubr.bf16.gmra.mrb[0].mxu0 %v220
    %v353 = vpop.f32.mrb[0].mxu0
    %v354 = vadd.f32 0.0, %v353
    %v355 = vpop.f32.mrb[0].mxu0
    %v356 = vpop.f32.mrb[0].mxu0
    %v357 = vadd.f32 0.0, %v356
    %v358 = vpop.f32.mrb[0].mxu0
    %359 = vmatprep.mubr.bf16.mxu0 0
    %360 = vmatmul.mubr.bf16.gmra.mrb[0].mxu0 %v221
    %v361 = vpop.f32.mrb[0].mxu0
    %v362 = vadd.f32 0.0, %v361
    %v363 = vpop.f32.mrb[0].mxu0
    %v364 = vpop.f32.mrb[0].mxu0
    %v365 = vadd.f32 0.0, %v364
    %v366 = vpop.f32.mrb[0].mxu0
    %367 = vmatprep.mubr.bf16.mxu0 0
    %368 = vmatmul.mubr.bf16.gmra.mrb[0].mxu0 %v222
    %v369 = vpop.f32.mrb[0].mxu0
    %v370 = vadd.f32 0.0, %v369
    %v371 = vpop.f32.mrb[0].mxu0
    %v372 = vpop.f32.mrb[0].mxu0
    %v373 = vadd.f32 0.0, %v372
    %v374 = vpop.f32.mrb[0].mxu0
    %375 = vmatprep.mubr.bf16.mxu0 0
    %376 = vmatmul.mubr.bf16.gmra.mrb[0].mxu0 %v223
    %v377 = vpop.f32.mrb[0].mxu0
    %v378 = vadd.f32 0.0, %v377
    %v379 = vpop.f32.mrb[0].mxu0
    %v380 = vpop.f32.mrb[0].mxu0
    %v381 = vadd.f32 0.0, %v380
    %v382 = vpop.f32.mrb[0].mxu0
    %383 = vmatprep.mubr.bf16.mxu0 0
    %384 = vmatmul.mubr.bf16.gmra.mrb[0].mxu0 %v224
    %v385 = vpop.f32.mrb[0].mxu0
    %v386 = vadd.f32 0.0, %v385
    %v387 = vpop.f32.mrb[0].mxu0
    %v388 = vpop.f32.mrb[0].mxu0
    %v389 = vadd.f32 0.0, %v388
    %v390 = vpop.f32.mrb[0].mxu0
    %391 = vmatprep.mubr.bf16.mxu0 0
    %392 = vmatmul.mubr.bf16.gmra.mrb[0].mxu0 %v225
    %v393 = vpop.f32.mrb[0].mxu0
    %v394 = vadd.f32 0.0, %v393
    %v395 = vpop.f32.mrb[0].mxu0
    %v396 = vpop.f32.mrb[0].mxu0
    %v397 = vadd.f32 0.0, %v396
    %v398 = vpop.f32.mrb[0].mxu0
    %399 = vmatprep.mubr.bf16.mxu0 0
    %400 = vmatmul.mubr.bf16.gmra.mrb[0].mxu0 %v226
    %v401 = vpop.f32.mrb[0].mxu0
    %v402 = vadd.f32 0.0, %v401
    %v403 = vpop.f32.mrb[0].mxu0
    %v404 = vpop.f32.mrb[0].mxu0
    %v405 = vadd.f32 0.0, %v404
    %v406 = vpop.f32.mrb[0].mxu0
    %407 = vmatprep.mubr.bf16.mxu0 0
    %408 = vmatmul.mubr.bf16.gmra.mrb[0].mxu0 %v227
    %v409 = vpop.f32.mrb[0].mxu0
    %v410 = vadd.f32 0.0, %v409
    %v411 = vpop.f32.mrb[0].mxu0
    %v412 = vpop.f32.mrb[0].mxu0
    %v413 = vadd.f32 0.0, %v412
    %v414 = vpop.f32.mrb[0].mxu0
    %415 = vmatprep.mubr.bf16.mxu0 0
    %416 = vmatmul.mubr.bf16.gmra.mrb[0].mxu0 %v228
    %v417 = vpop.f32.mrb[0].mxu0
    %v418 = vadd.f32 0.0, %v417
    %v419 = vpop.f32.mrb[0].mxu0
    %v420 = vpop.f32.mrb[0].mxu0
    %v421 = vadd.f32 0.0, %v420
    %v422 = vpop.f32.mrb[0].mxu0
    %423 = vmatprep.mubr.bf16.mxu0 0
    %424 = vmatmul.mubr.bf16.gmra.mrb[0].mxu0 %v229
    %v425 = vpop.f32.mrb[0].mxu0
    %v426 = vadd.f32 0.0, %v425
    %v427 = vpop.f32.mrb[0].mxu0
    %v428 = vpop.f32.mrb[0].mxu0
    %v429 = vadd.f32 0.0, %v428
    %v430 = vpop.f32.mrb[0].mxu0
    %431 = vmatprep.mubr.bf16.mxu0 0
    %432 = vmatmul.mubr.bf16.gmra.mrb[0].mxu0 %v230
    %v433 = vpop.f32.mrb[0].mxu0
    %v434 = vadd.f32 0.0, %v433
    %v435 = vpop.f32.mrb[0].mxu0
    %v436 = vpop.f32.mrb[0].mxu0
    %v437 = vadd.f32 0.0, %v436
    %v438 = vpop.f32.mrb[0].mxu0
    %439 = vdwg.mxu0
    %v440 = vpack.c.bf16 %v317, %v314
    %v441 = vpack.c.bf16 %v325, %v322
    %v442 = vpack.c.bf16 %v333, %v330
    %v443 = vpack.c.bf16 %v341, %v338
    %v444 = vpack.c.bf16 %v349, %v346
    %v445 = vpack.c.bf16 %v357, %v354
    %v446 = vpack.c.bf16 %v365, %v362
    %v447 = vpack.c.bf16 %v373, %v370
    %v448 = vpack.c.bf16 %v381, %v378
    %v449 = vpack.c.bf16 %v389, %v386
    %v450 = vpack.c.bf16 %v397, %v394
    %v451 = vpack.c.bf16 %v405, %v402
    %v452 = vpack.c.bf16 %v413, %v410
    %v453 = vpack.c.bf16 %v421, %v418
    %v454 = vpack.c.bf16 %v429, %v426
    %v455 = vpack.c.bf16 %v437, %v434
    %v472 = vunpack.c.l.b16 %v440
    %v473 = vunpack.c.h.b16 %v440
    %v474 = vunpack.c.l.b16 %v441
    %v475 = vunpack.c.h.b16 %v441
    %v476 = vunpack.c.l.b16 %v442
    %v477 = vunpack.c.h.b16 %v442
    %v478 = vunpack.c.l.b16 %v443
    %v479 = vunpack.c.h.b16 %v443
    %v480 = vunpack.c.l.b16 %v444
    %v481 = vunpack.c.h.b16 %v444
    %v482 = vunpack.c.l.b16 %v445
    %v483 = vunpack.c.h.b16 %v445
    %v484 = vunpack.c.l.b16 %v446
    %v485 = vunpack.c.h.b16 %v446
    %v486 = vunpack.c.l.b16 %v447
    %v487 = vunpack.c.h.b16 %v447
    %v488 = vunpack.c.l.b16 %v448
    %v489 = vunpack.c.h.b16 %v448
    %v490 = vunpack.c.l.b16 %v449
    %v491 = vunpack.c.h.b16 %v449
    %v492 = vunpack.c.l.b16 %v450
    %v493 = vunpack.c.h.b16 %v450
    %v494 = vunpack.c.l.b16 %v451
    %v495 = vunpack.c.h.b16 %v451
    %v496 = vunpack.c.l.b16 %v452
    %v497 = vunpack.c.h.b16 %v452
    %v498 = vunpack.c.l.b16 %v453
    %v499 = vunpack.c.h.b16 %v453
    %v500 = vunpack.c.l.b16 %v454
    %v501 = vunpack.c.h.b16 %v454
    %v502 = vunpack.c.l.b16 %v455
    %v503 = vunpack.c.h.b16 %v455
    %v504 = vpack.c.b16 %v472, %v472
    %v505 = vpack.c.b16 %v473, %v473
    %v506 = vpack.c.b16 %v474, %v474
    %v507 = vpack.c.b16 %v475, %v475
    %v508 = vpack.c.b16 %v476, %v476
    %v509 = vpack.c.b16 %v477, %v477
    %v510 = vpack.c.b16 %v478, %v478
    %v511 = vpack.c.b16 %v479, %v479
    %v512 = vpack.c.b16 %v480, %v480
    %v513 = vpack.c.b16 %v481, %v481
    %v514 = vpack.c.b16 %v482, %v482
    %v515 = vpack.c.b16 %v483, %v483
    %v516 = vpack.c.b16 %v484, %v484
    %v517 = vpack.c.b16 %v485, %v485
    %v518 = vpack.c.b16 %v486, %v486
    %v519 = vpack.c.b16 %v487, %v487
    %v520 = vpack.c.b16 %v488, %v488
    %v521 = vpack.c.b16 %v489, %v489
    %v522 = vpack.c.b16 %v490, %v490
    %v523 = vpack.c.b16 %v491, %v491
    %v524 = vpack.c.b16 %v492, %v492
    %v525 = vpack.c.b16 %v493, %v493
    %v526 = vpack.c.b16 %v494, %v494
    %v527 = vpack.c.b16 %v495, %v495
    %v528 = vpack.c.b16 %v496, %v496
    %v529 = vpack.c.b16 %v497, %v497
    %v530 = vpack.c.b16 %v498, %v498
    %v531 = vpack.c.b16 %v499, %v499
    %v532 = vpack.c.b16 %v500, %v500
    %v533 = vpack.c.b16 %v501, %v501
    %v534 = vpack.c.b16 %v502, %v502
    %v535 = vpack.c.b16 %v503, %v503
    %568 = vst [vmem:[%s4] sm:$0xf] %v504
    %569 = vst [vmem:[%s4 + $0x4] sm:$0xf] %v505
    %570 = vst [vmem:[%s4 + $0x8] sm:$0xf] %v506
    %571 = vst [vmem:[%s4 + $0xc] sm:$0xf] %v507
    %572 = vst [vmem:[%s4 + $0x10] sm:$0xf] %v508
    %573 = vst [vmem:[%s4 + $0x14] sm:$0xf] %v509
    %574 = vst [vmem:[%s4 + $0x18] sm:$0xf] %v510
    %575 = vst [vmem:[%s4 + $0x1c] sm:$0xf] %v511
    %576 = vst [vmem:[%s4 + $0x20] sm:$0xf] %v512
    %577 = vst [vmem:[%s4 + $0x24] sm:$0xf] %v513
    %578 = vst [vmem:[%s4 + $0x28] sm:$0xf] %v514
    %579 = vst [vmem:[%s4 + $0x2c] sm:$0xf] %v515
    %580 = vst [vmem:[%s4 + $0x30] sm:$0xf] %v516
    %581 = vst [vmem:[%s4 + $0x34] sm:$0xf] %v517
    %582 = vst [vmem:[%s4 + $0x38] sm:$0xf] %v518
    %583 = vst [vmem:[%s4 + $0x3c] sm:$0xf] %v519
    %584 = vst [vmem:[%s4 + $0x40] sm:$0xf] %v520
    %585 = vst [vmem:[%s4 + $0x44] sm:$0xf] %v521
    %586 = vst [vmem:[%s4 + $0x48] sm:$0xf] %v522
    %587 = vst [vmem:[%s4 + $0x4c] sm:$0xf] %v523
    %588 = vst [vmem:[%s4 + $0x50] sm:$0xf] %v524
    %589 = vst [vmem:[%s4 + $0x54] sm:$0xf] %v525
    %590 = vst [vmem:[%s4 + $0x58] sm:$0xf] %v526
    %591 = vst [vmem:[%s4 + $0x5c] sm:$0xf] %v527
    %592 = vst [vmem:[%s4 + $0x60] sm:$0xf] %v528
    %593 = vst [vmem:[%s4 + $0x64] sm:$0xf] %v529
    %594 = vst [vmem:[%s4 + $0x68] sm:$0xf] %v530
    %595 = vst [vmem:[%s4 + $0x6c] sm:$0xf] %v531
    %596 = vst [vmem:[%s4 + $0x70] sm:$0xf] %v532
    %597 = vst [vmem:[%s4 + $0x74] sm:$0xf] %v533
    %598 = vst [vmem:[%s4 + $0x78] sm:$0xf] %v534
    %599 = vst [vmem:[%s4 + $0x7c] sm:$0xf] %v535
    %v600 = vunpack.c.l.bf16 %v440
    %v601 = vunpack.c.h.bf16 %v440
    %v602 = vunpack.c.l.bf16 %v441
    %v603 = vunpack.c.h.bf16 %v441
    %v604 = vunpack.c.l.bf16 %v442
    %v605 = vunpack.c.h.bf16 %v442
    %v606 = vunpack.c.l.bf16 %v443
    %v607 = vunpack.c.h.bf16 %v443
    %v608 = vunpack.c.l.bf16 %v444
    %v609 = vunpack.c.h.bf16 %v444
    %v610 = vunpack.c.l.bf16 %v445
    %v611 = vunpack.c.h.bf16 %v445
    %v612 = vunpack.c.l.bf16 %v446
    %v613 = vunpack.c.h.bf16 %v446
    %v614 = vunpack.c.l.bf16 %v447
    %v615 = vunpack.c.h.bf16 %v447
    %v616 = vunpack.c.l.bf16 %v448
    %v617 = vunpack.c.h.bf16 %v448
    %v618 = vunpack.c.l.bf16 %v449
    %v619 = vunpack.c.h.bf16 %v449
    %v620 = vunpack.c.l.bf16 %v450
    %v621 = vunpack.c.h.bf16 %v450
    %v622 = vunpack.c.l.bf16 %v451
    %v623 = vunpack.c.h.bf16 %v451
    %v624 = vunpack.c.l.bf16 %v452
    %v625 = vunpack.c.h.bf16 %v452
    %v626 = vunpack.c.l.bf16 %v453
    %v627 = vunpack.c.h.bf16 %v453
    %v628 = vunpack.c.l.bf16 %v454
    %v629 = vunpack.c.h.bf16 %v454
    %v630 = vunpack.c.l.bf16 %v455
    %v631 = vunpack.c.h.bf16 %v455
    %v632 = vadd.f32 %v600, %v601
    %v633 = vadd.f32 %v632, %v602
    %v634 = vadd.f32 %v633, %v603
    %v635 = vadd.f32 %v634, %v604
    %v636 = vadd.f32 %v635, %v605
    %v637 = vadd.f32 %v636, %v606
    %v638 = vadd.f32 %v637, %v607
    %v639 = vadd.f32 %v638, %v608
    %v640 = vadd.f32 %v639, %v609
    %v641 = vadd.f32 %v640, %v610
    %v642 = vadd.f32 %v641, %v611
    %v643 = vadd.f32 %v642, %v612
    %v644 = vadd.f32 %v643, %v613
    %v645 = vadd.f32 %v644, %v614
    %v646 = vadd.f32 %v645, %v615
    %v647 = vadd.f32 %v646, %v616
    %v648 = vadd.f32 %v647, %v617
    %v649 = vadd.f32 %v648, %v618
    %v650 = vadd.f32 %v649, %v619
    %v651 = vadd.f32 %v650, %v620
    %v652 = vadd.f32 %v651, %v621
    %v653 = vadd.f32 %v652, %v622
    %v654 = vadd.f32 %v653, %v623
    %v655 = vadd.f32 %v654, %v624
    %v656 = vadd.f32 %v655, %v625
    %v657 = vadd.f32 %v656, %v626
    %v658 = vadd.f32 %v657, %v627
    %v659 = vadd.f32 %v658, %v628
    %v660 = vadd.f32 %v659, %v629
    %v661 = vadd.f32 %v660, %v630
    %v662 = vadd.f32 %v661, %v631
    %v663 = vrot.slane %v662, 4
    %v664 = vadd.f32 %v662, %v663
    %v665 = vrot.slane %v664, 2
    %v666 = vadd.f32 %v664, %v665
    %v667 = vrot.slane %v666, 1
    %v668 = vadd.f32 %v666, %v667
    %669 = vst [vmem:[%s5] sm:$0x1] %v668
    %v670 = vmul.f32 %v600, %v600
    %v671 = vmul.f32 %v601, %v601
    %v672 = vmul.f32 %v602, %v602
    %v673 = vmul.f32 %v603, %v603
    %v674 = vmul.f32 %v604, %v604
    %v675 = vmul.f32 %v605, %v605
    %v676 = vmul.f32 %v606, %v606
    %v677 = vmul.f32 %v607, %v607
    %v678 = vmul.f32 %v608, %v608
    %v679 = vmul.f32 %v609, %v609
    %v680 = vmul.f32 %v610, %v610
    %v681 = vmul.f32 %v611, %v611
    %v682 = vmul.f32 %v612, %v612
    %v683 = vmul.f32 %v613, %v613
    %v684 = vmul.f32 %v614, %v614
    %v685 = vmul.f32 %v615, %v615
    %v686 = vmul.f32 %v616, %v616
    %v687 = vmul.f32 %v617, %v617
    %v688 = vmul.f32 %v618, %v618
    %v689 = vmul.f32 %v619, %v619
    %v690 = vmul.f32 %v620, %v620
    %v691 = vmul.f32 %v621, %v621
    %v692 = vmul.f32 %v622, %v622
    %v693 = vmul.f32 %v623, %v623
    %v694 = vmul.f32 %v624, %v624
    %v695 = vmul.f32 %v625, %v625
    %v696 = vmul.f32 %v626, %v626
    %v697 = vmul.f32 %v627, %v627
    %v698 = vmul.f32 %v628, %v628
    %v699 = vmul.f32 %v629, %v629
    %v700 = vmul.f32 %v630, %v630
    %v701 = vmul.f32 %v631, %v631
    %v702 = vadd.f32 %v670, %v671
    %v703 = vadd.f32 %v702, %v672
    %v704 = vadd.f32 %v703, %v673
    %v705 = vadd.f32 %v704, %v674
    %v706 = vadd.f32 %v705, %v675
    %v707 = vadd.f32 %v706, %v676
    %v708 = vadd.f32 %v707, %v677
    %v709 = vadd.f32 %v708, %v678
    %v710 = vadd.f32 %v709, %v679
    %v711 = vadd.f32 %v710, %v680
    %v712 = vadd.f32 %v711, %v681
    %v713 = vadd.f32 %v712, %v682
    %v714 = vadd.f32 %v713, %v683
    %v715 = vadd.f32 %v714, %v684
    %v716 = vadd.f32 %v715, %v685
    %v717 = vadd.f32 %v716, %v686
    %v718 = vadd.f32 %v717, %v687
    %v719 = vadd.f32 %v718, %v688
    %v720 = vadd.f32 %v719, %v689
    %v721 = vadd.f32 %v720, %v690
    %v722 = vadd.f32 %v721, %v691
    %v723 = vadd.f32 %v722, %v692
    %v724 = vadd.f32 %v723, %v693
    %v725 = vadd.f32 %v724, %v694
    %v726 = vadd.f32 %v725, %v695
    %v727 = vadd.f32 %v726, %v696
    %v728 = vadd.f32 %v727, %v697
    %v729 = vadd.f32 %v728, %v698
    %v730 = vadd.f32 %v729, %v699
    %v731 = vadd.f32 %v730, %v700
    %v732 = vadd.f32 %v731, %v701
    %v733 = vrot.slane %v732, 4
    %v734 = vadd.f32 %v732, %v733
    %v735 = vrot.slane %v734, 2
    %v736 = vadd.f32 %v734, %v735
    %v737 = vrot.slane %v736, 1
    %v738 = vadd.f32 %v736, %v737
    %739 = vst [vmem:[%s6] sm:$0x1] %v738
  $region21: #{gin_edge_aggregator.4} parent=0 // pred_fallthru
    _
  %p740 = scmp.eq.s32.totalorder 0, 0
  // Predicated region
  $region22: #{gin_edge_aggregator.4} parent=0 // pred_check
    %p741 = pneg %p740
  $region23: #{gin_edge_aggregator.4} parent=0 // pred_check_branch
    %743 = sbr.rel (%p741) target = $region25
  $region24: #{gin_edge_aggregator.4} parent=0 // pred_region
    %s744 = smul.u32 0, 256
    %v745 = vlaneseq
    %v746 = vshrl.u32 %v745, 7
    %v747 = vadd.s32 %v746, 8
    %v748 = vadd.s32 %v746, 16
    %v749 = vadd.s32 %v746, 24
    %v750 = vadd.s32 %v746, 32
    %v751 = vadd.s32 %v746, 40
    %v752 = vadd.s32 %v746, 48
    %v753 = vadd.s32 %v746, 56
    %v754 = vadd.s32 %v746, 64
    %v755 = vadd.s32 %v746, 72
    %v756 = vadd.s32 %v746, 80
    %v757 = vadd.s32 %v746, 88
    %v758 = vadd.s32 %v746, 96
    %v759 = vadd.s32 %v746, 104
    %v760 = vadd.s32 %v746, 112
    %v761 = vadd.s32 %v746, 120
    %v762 = vadd.s32 %v746, 128
    %v763 = vadd.s32 %v746, 136
    %v764 = vadd.s32 %v746, 144
    %v765 = vadd.s32 %v746, 152
    %v766 = vadd.s32 %v746, 160
    %v767 = vadd.s32 %v746, 168
    %v768 = vadd.s32 %v746, 176
    %v769 = vadd.s32 %v746, 184
    %v770 = vadd.s32 %v746, 192
    %v771 = vadd.s32 %v746, 200
    %v772 = vadd.s32 %v746, 208
    %v773 = vadd.s32 %v746, 216
    %v774 = vadd.s32 %v746, 224
    %v775 = vadd.s32 %v746, 232
    %v776 = vadd.s32 %v746, 240
    %v777 = vadd.s32 %v746, 248
    %v778 = vstv %s744
    %v779 = vadd.s32 %v778, %v746
    %v780 = vadd.s32 %v778, %v747
    %v781 = vadd.s32 %v778, %v748
    %v782 = vadd.s32 %v778, %v749
    %v783 = vadd.s32 %v778, %v750
    %v784 = vadd.s32 %v778, %v751
    %v785 = vadd.s32 %v778, %v752
    %v786 = vadd.s32 %v778, %v753
    %v787 = vadd.s32 %v778, %v754
    %v788 = vadd.s32 %v778, %v755
    %v789 = vadd.s32 %v778, %v756
    %v790 = vadd.s32 %v778, %v757
    %v791 = vadd.s32 %v778, %v758
    %v792 = vadd.s32 %v778, %v759
    %v793 = vadd.s32 %v778, %v760
    %v794 = vadd.s32 %v778, %v761
    %v795 = vadd.s32 %v778, %v762
    %v796 = vadd.s32 %v778, %v763
    %v797 = vadd.s32 %v778, %v764
    %v798 = vadd.s32 %v778, %v765
    %v799 = vadd.s32 %v778, %v766
    %v800 = vadd.s32 %v778, %v767
    %v801 = vadd.s32 %v778, %v768
    %v802 = vadd.s32 %v778, %v769
    %v803 = vadd.s32 %v778, %v770
    %v804 = vadd.s32 %v778, %v771
    %v805 = vadd.s32 %v778, %v772
    %v806 = vadd.s32 %v778, %v773
    %v807 = vadd.s32 %v778, %v774
    %v808 = vadd.s32 %v778, %v775
    %v809 = vadd.s32 %v778, %v776
    %v810 = vadd.s32 %v778, %v777
    %vm811 = vcmp.lt.s32.totalorder %v779, 8
    %vm812 = vcmp.lt.s32.totalorder %v780, 8
    %vm813 = vcmp.lt.s32.totalorder %v781, 8
    %vm814 = vcmp.lt.s32.totalorder %v782, 8
    %vm815 = vcmp.lt.s32.totalorder %v783, 8
    %vm816 = vcmp.lt.s32.totalorder %v784, 8
    %vm817 = vcmp.lt.s32.totalorder %v785, 8
    %vm818 = vcmp.lt.s32.totalorder %v786, 8
    %vm819 = vcmp.lt.s32.totalorder %v787, 8
    %vm820 = vcmp.lt.s32.totalorder %v788, 8
    %vm821 = vcmp.lt.s32.totalorder %v789, 8
    %vm822 = vcmp.lt.s32.totalorder %v790, 8
    %vm823 = vcmp.lt.s32.totalorder %v791, 8
    %vm824 = vcmp.lt.s32.totalorder %v792, 8
    %vm825 = vcmp.lt.s32.totalorder %v793, 8
    %vm826 = vcmp.lt.s32.totalorder %v794, 8
    %vm827 = vcmp.lt.s32.totalorder %v795, 8
    %vm828 = vcmp.lt.s32.totalorder %v796, 8
    %vm829 = vcmp.lt.s32.totalorder %v797, 8
    %vm830 = vcmp.lt.s32.totalorder %v798, 8
    %vm831 = vcmp.lt.s32.totalorder %v799, 8
    %vm832 = vcmp.lt.s32.totalorder %v800, 8
    %vm833 = vcmp.lt.s32.totalorder %v801, 8
    %vm834 = vcmp.lt.s32.totalorder %v802, 8
    %vm835 = vcmp.lt.s32.totalorder %v803, 8
    %vm836 = vcmp.lt.s32.totalorder %v804, 8
    %vm837 = vcmp.lt.s32.totalorder %v805, 8
    %vm838 = vcmp.lt.s32.totalorder %v806, 8
    %vm839 = vcmp.lt.s32.totalorder %v807, 8
    %vm840 = vcmp.lt.s32.totalorder %v808, 8
    %vm841 = vcmp.lt.s32.totalorder %v809, 8
    %vm842 = vcmp.lt.s32.totalorder %v810, 8
    %v843 = vsel %vm811, %v163, 0.0
    %v844 = vsel %vm812, %v164, 0.0
    %v845 = vsel %vm813, %v165, 0.0
    %v846 = vsel %vm814, %v166, 0.0
    %v847 = vsel %vm815, %v167, 0.0
    %v848 = vsel %vm816, %v168, 0.0
    %v849 = vsel %vm817, %v169, 0.0
    %v850 = vsel %vm818, %v170, 0.0
    %v851 = vsel %vm819, %v171, 0.0
    %v852 = vsel %vm820, %v172, 0.0
    %v853 = vsel %vm821, %v173, 0.0
    %v854 = vsel %vm822, %v174, 0.0
    %v855 = vsel %vm823, %v175, 0.0
    %v856 = vsel %vm824, %v176, 0.0
    %v857 = vsel %vm825, %v177, 0.0
    %v858 = vsel %vm826, %v178, 0.0
    %v859 = vsel %vm827, %v179, 0.0
    %v860 = vsel %vm828, %v180, 0.0
    %v861 = vsel %vm829, %v181, 0.0
    %v862 = vsel %vm830, %v182, 0.0
    %v863 = vsel %vm831, %v183, 0.0
    %v864 = vsel %vm832, %v184, 0.0
    %v865 = vsel %vm833, %v185, 0.0
    %v866 = vsel %vm834, %v186, 0.0
    %v867 = vsel %vm835, %v187, 0.0
    %v868 = vsel %vm836, %v188, 0.0
    %v869 = vsel %vm837, %v189, 0.0
    %v870 = vsel %vm838, %v190, 0.0
    %v871 = vsel %vm839, %v191, 0.0
    %v872 = vsel %vm840, %v192, 0.0
    %v873 = vsel %vm841, %v193, 0.0
    %v874 = vsel %vm842, %v194, 0.0
    %v875 = vpack.c.bf16 %v844, %v843
    %v876 = vpack.c.bf16 %v846, %v845
    %v877 = vpack.c.bf16 %v848, %v847
    %v878 = vpack.c.bf16 %v850, %v849
    %v879 = vpack.c.bf16 %v852, %v851
    %v880 = vpack.c.bf16 %v854, %v853
    %v881 = vpack.c.bf16 %v856, %v855
    %v882 = vpack.c.bf16 %v858, %v857
    %v883 = vpack.c.bf16 %v860, %v859
    %v884 = vpack.c.bf16 %v862, %v861
    %v885 = vpack.c.bf16 %v864, %v863
    %v886 = vpack.c.bf16 %v866, %v865
    %v887 = vpack.c.bf16 %v868, %v867
    %v888 = vpack.c.bf16 %v870, %v869
    %v889 = vpack.c.bf16 %v872, %v871
    %v890 = vpack.c.bf16 %v874, %v873
    %v907 = vunpack.c.l.b16 %v195
    %v908 = vunpack.c.l.b16 %v196
    %v909 = vunpack.c.l.b16 %v197
    %v910 = vunpack.c.l.b16 %v198
    %v911 = vunpack.c.l.b16 %v199
    %v912 = vunpack.c.l.b16 %v200
    %v913 = vunpack.c.l.b16 %v201
    %v914 = vunpack.c.l.b16 %v202
    %v915 = vunpack.c.l.b16 %v203
    %v916 = vunpack.c.l.b16 %v204
    %v917 = vunpack.c.l.b16 %v205
    %v918 = vunpack.c.l.b16 %v206
    %v919 = vunpack.c.l.b16 %v207
    %v920 = vunpack.c.l.b16 %v208
    %v921 = vunpack.c.l.b16 %v209
    %v922 = vunpack.c.l.b16 %v210
    %v923 = vpack.c.b16 %v908, %v907
    %v924 = vpack.c.b16 %v910, %v909
    %v925 = vpack.c.b16 %v912, %v911
    %v926 = vpack.c.b16 %v914, %v913
    %v927 = vpack.c.b16 %v916, %v915
    %v928 = vpack.c.b16 %v918, %v917
    %v929 = vpack.c.b16 %v920, %v919
    %v930 = vpack.c.b16 %v922, %v921
    %939 = vmatprep.subr.bf16.mxu0 0
    %940 = vmatpush1.bf16.msra.mxu0 %v923
    %941 = vmatprep.subr.bf16.mxu0 0
    %942 = vmatpush1.bf16.msra.mxu0 %v924
    %943 = vmatprep.subr.bf16.mxu0 0
    %944 = vmatpush1.bf16.msra.mxu0 %v925
    %945 = vmatprep.subr.bf16.mxu0 0
    %946 = vmatpush1.bf16.msra.mxu0 %v926
    %947 = vmatprep.subr.bf16.mxu0 0
    %948 = vmatpush1.bf16.msra.mxu0 %v927
    %949 = vmatprep.subr.bf16.mxu0 0
    %950 = vmatpush1.bf16.msra.mxu0 %v928
    %951 = vmatprep.subr.bf16.mxu0 0
    %952 = vmatpush1.bf16.msra.mxu0 %v929
    %953 = vmatprep.subr.bf16.mxu0 0
    %954 = vmatpush1.bf16.msra.mxu0 %v930
    %955 = vmatprep.subr.bf16.mxu0 0
    %956 = vmatpush1.bf16.msra.mxu0 0
    %957 = vmatprep.subr.bf16.mxu0 0
    %958 = vmatpush1.bf16.msra.mxu0 0
    %959 = vmatprep.subr.bf16.mxu0 0
    %960 = vmatpush1.bf16.msra.mxu0 0
    %961 = vmatprep.subr.bf16.mxu0 0
    %962 = vmatpush1.bf16.msra.mxu0 0
    %963 = vmatprep.subr.bf16.mxu0 0
    %964 = vmatpush1.bf16.msra.mxu0 0
    %965 = vmatprep.subr.bf16.mxu0 0
    %966 = vmatpush1.bf16.msra.mxu0 0
    %967 = vmatprep.subr.bf16.mxu0 0
    %968 = vmatpush1.bf16.msra.mxu0 0
    %969 = vmatprep.subr.bf16.mxu0 0
    %970 = vmatpush1.bf16.msra.mxu0 0
    %971 = vmatprep.mubr.bf16.mxu0 0
    %972 = vmatmul.mubr.bf16.gmra.mrb[0].mxu0 %v875
    %v973 = vpop.f32.mrb[0].mxu0
    %v974 = vadd.f32 0.0, %v973
    %v975 = vpop.f32.mrb[0].mxu0
    %v976 = vpop.f32.mrb[0].mxu0
    %v977 = vadd.f32 0.0, %v976
    %v978 = vpop.f32.mrb[0].mxu0
    %979 = vmatprep.mubr.bf16.mxu0 0
    %980 = vmatmul.mubr.bf16.gmra.mrb[0].mxu0 %v876
    %v981 = vpop.f32.mrb[0].mxu0
    %v982 = vadd.f32 0.0, %v981
    %v983 = vpop.f32.mrb[0].mxu0
    %v984 = vpop.f32.mrb[0].mxu0
    %v985 = vadd.f32 0.0, %v984
    %v986 = vpop.f32.mrb[0].mxu0
    %987 = vmatprep.mubr.bf16.mxu0 0
    %988 = vmatmul.mubr.bf16.gmra.mrb[0].mxu0 %v877
    %v989 = vpop.f32.mrb[0].mxu0
    %v990 = vadd.f32 0.0, %v989
    %v991 = vpop.f32.mrb[0].mxu0
    %v992 = vpop.f32.mrb[0].mxu0
    %v993 = vadd.f32 0.0, %v992
    %v994 = vpop.f32.mrb[0].mxu0
    %995 = vmatprep.mubr.bf16.mxu0 0
    %996 = vmatmul.mubr.bf16.gmra.mrb[0].mxu0 %v878
    %v997 = vpop.f32.mrb[0].mxu0
    %v998 = vadd.f32 0.0, %v997
    %v999 = vpop.f32.mrb[0].mxu0
    %v1000 = vpop.f32.mrb[0].mxu0
    %v1001 = vadd.f32 0.0, %v1000
    %v1002 = vpop.f32.mrb[0].mxu0
    %1003 = vmatprep.mubr.bf16.mxu0 0
    %1004 = vmatmul.mubr.bf16.gmra.mrb[0].mxu0 %v879
    %v1005 = vpop.f32.mrb[0].mxu0
    %v1006 = vadd.f32 0.0, %v1005
    %v1007 = vpop.f32.mrb[0].mxu0
    %v1008 = vpop.f32.mrb[0].mxu0
    %v1009 = vadd.f32 0.0, %v1008
    %v1010 = vpop.f32.mrb[0].mxu0
    %1011 = vmatprep.mubr.bf16.mxu0 0
    %1012 = vmatmul.mubr.bf16.gmra.mrb[0].mxu0 %v880
    %v1013 = vpop.f32.mrb[0].mxu0
    %v1014 = vadd.f32 0.0, %v1013
    %v1015 = vpop.f32.mrb[0].mxu0
    %v1016 = vpop.f32.mrb[0].mxu0
    %v1017 = vadd.f32 0.0, %v1016
    %v1018 = vpop.f32.mrb[0].mxu0
    %1019 = vmatprep.mubr.bf16.mxu0 0
    %1020 = vmatmul.mubr.bf16.gmra.mrb[0].mxu0 %v881
    %v1021 = vpop.f32.mrb[0].mxu0
    %v1022 = vadd.f32 0.0, %v1021
    %v1023 = vpop.f32.mrb[0].mxu0
    %v1024 = vpop.f32.mrb[0].mxu0
    %v1025 = vadd.f32 0.0, %v1024
    %v1026 = vpop.f32.mrb[0].mxu0
    %1027 = vmatprep.mubr.bf16.mxu0 0
    %1028 = vmatmul.mubr.bf16.gmra.mrb[0].mxu0 %v882
    %v1029 = vpop.f32.mrb[0].mxu0
    %v1030 = vadd.f32 0.0, %v1029
    %v1031 = vpop.f32.mrb[0].mxu0
    %v1032 = vpop.f32.mrb[0].mxu0
    %v1033 = vadd.f32 0.0, %v1032
    %v1034 = vpop.f32.mrb[0].mxu0
    %1035 = vmatprep.mubr.bf16.mxu0 0
    %1036 = vmatmul.mubr.bf16.gmra.mrb[0].mxu0 %v883
    %v1037 = vpop.f32.mrb[0].mxu0
    %v1038 = vadd.f32 0.0, %v1037
    %v1039 = vpop.f32.mrb[0].mxu0
    %v1040 = vpop.f32.mrb[0].mxu0
    %v1041 = vadd.f32 0.0, %v1040
    %v1042 = vpop.f32.mrb[0].mxu0
    %1043 = vmatprep.mubr.bf16.mxu0 0
    %1044 = vmatmul.mubr.bf16.gmra.mrb[0].mxu0 %v884
    %v1045 = vpop.f32.mrb[0].mxu0
    %v1046 = vadd.f32 0.0, %v1045
    %v1047 = vpop.f32.mrb[0].mxu0
    %v1048 = vpop.f32.mrb[0].mxu0
    %v1049 = vadd.f32 0.0, %v1048
    %v1050 = vpop.f32.mrb[0].mxu0
    %1051 = vmatprep.mubr.bf16.mxu0 0
    %1052 = vmatmul.mubr.bf16.gmra.mrb[0].mxu0 %v885
    %v1053 = vpop.f32.mrb[0].mxu0
    %v1054 = vadd.f32 0.0, %v1053
    %v1055 = vpop.f32.mrb[0].mxu0
    %v1056 = vpop.f32.mrb[0].mxu0
    %v1057 = vadd.f32 0.0, %v1056
    %v1058 = vpop.f32.mrb[0].mxu0
    %1059 = vmatprep.mubr.bf16.mxu0 0
    %1060 = vmatmul.mubr.bf16.gmra.mrb[0].mxu0 %v886
    %v1061 = vpop.f32.mrb[0].mxu0
    %v1062 = vadd.f32 0.0, %v1061
    %v1063 = vpop.f32.mrb[0].mxu0
    %v1064 = vpop.f32.mrb[0].mxu0
    %v1065 = vadd.f32 0.0, %v1064
    %v1066 = vpop.f32.mrb[0].mxu0
    %1067 = vmatprep.mubr.bf16.mxu0 0
    %1068 = vmatmul.mubr.bf16.gmra.mrb[0].mxu0 %v887
    %v1069 = vpop.f32.mrb[0].mxu0
    %v1070 = vadd.f32 0.0, %v1069
    %v1071 = vpop.f32.mrb[0].mxu0
    %v1072 = vpop.f32.mrb[0].mxu0
    %v1073 = vadd.f32 0.0, %v1072
    %v1074 = vpop.f32.mrb[0].mxu0
    %1075 = vmatprep.mubr.bf16.mxu0 0
    %1076 = vmatmul.mubr.bf16.gmra.mrb[0].mxu0 %v888
    %v1077 = vpop.f32.mrb[0].mxu0
    %v1078 = vadd.f32 0.0, %v1077
    %v1079 = vpop.f32.mrb[0].mxu0
    %v1080 = vpop.f32.mrb[0].mxu0
    %v1081 = vadd.f32 0.0, %v1080
    %v1082 = vpop.f32.mrb[0].mxu0
    %1083 = vmatprep.mubr.bf16.mxu0 0
    %1084 = vmatmul.mubr.bf16.gmra.mrb[0].mxu0 %v889
    %v1085 = vpop.f32.mrb[0].mxu0
    %v1086 = vadd.f32 0.0, %v1085
    %v1087 = vpop.f32.mrb[0].mxu0
    %v1088 = vpop.f32.mrb[0].mxu0
    %v1089 = vadd.f32 0.0, %v1088
    %v1090 = vpop.f32.mrb[0].mxu0
    %1091 = vmatprep.mubr.bf16.mxu0 0
    %1092 = vmatmul.mubr.bf16.gmra.mrb[0].mxu0 %v890
    %v1093 = vpop.f32.mrb[0].mxu0
    %v1094 = vadd.f32 0.0, %v1093
    %v1095 = vpop.f32.mrb[0].mxu0
    %v1096 = vpop.f32.mrb[0].mxu0
    %v1097 = vadd.f32 0.0, %v1096
    %v1098 = vpop.f32.mrb[0].mxu0
    %1099 = vdwg.mxu0
    %v1100 = vpack.c.bf16 %v977, %v974
    %v1101 = vpack.c.bf16 %v985, %v982
    %v1102 = vpack.c.bf16 %v993, %v990
    %v1103 = vpack.c.bf16 %v1001, %v998
    %v1104 = vpack.c.bf16 %v1009, %v1006
    %v1105 = vpack.c.bf16 %v1017, %v1014
    %v1106 = vpack.c.bf16 %v1025, %v1022
    %v1107 = vpack.c.bf16 %v1033, %v1030
    %v1108 = vpack.c.bf16 %v1041, %v1038
    %v1109 = vpack.c.bf16 %v1049, %v1046
    %v1110 = vpack.c.bf16 %v1057, %v1054
    %v1111 = vpack.c.bf16 %v1065, %v1062
    %v1112 = vpack.c.bf16 %v1073, %v1070
    %v1113 = vpack.c.bf16 %v1081, %v1078
    %v1114 = vpack.c.bf16 %v1089, %v1086
    %v1115 = vpack.c.bf16 %v1097, %v1094
    %v1132 = vunpack.c.l.b16 %v1100
    %v1133 = vunpack.c.h.b16 %v1100
    %v1134 = vunpack.c.l.b16 %v1101
    %v1135 = vunpack.c.h.b16 %v1101
    %v1136 = vunpack.c.l.b16 %v1102
    %v1137 = vunpack.c.h.b16 %v1102
    %v1138 = vunpack.c.l.b16 %v1103
    %v1139 = vunpack.c.h.b16 %v1103
    %v1140 = vunpack.c.l.b16 %v1104
    %v1141 = vunpack.c.h.b16 %v1104
    %v1142 = vunpack.c.l.b16 %v1105
    %v1143 = vunpack.c.h.b16 %v1105
    %v1144 = vunpack.c.l.b16 %v1106
    %v1145 = vunpack.c.h.b16 %v1106
    %v1146 = vunpack.c.l.b16 %v1107
    %v1147 = vunpack.c.h.b16 %v1107
    %v1148 = vunpack.c.l.b16 %v1108
    %v1149 = vunpack.c.h.b16 %v1108
    %v1150 = vunpack.c.l.b16 %v1109
    %v1151 = vunpack.c.h.b16 %v1109
    %v1152 = vunpack.c.l.b16 %v1110
    %v1153 = vunpack.c.h.b16 %v1110
    %v1154 = vunpack.c.l.b16 %v1111
    %v1155 = vunpack.c.h.b16 %v1111
    %v1156 = vunpack.c.l.b16 %v1112
    %v1157 = vunpack.c.h.b16 %v1112
    %v1158 = vunpack.c.l.b16 %v1113
    %v1159 = vunpack.c.h.b16 %v1113
    %v1160 = vunpack.c.l.b16 %v1114
    %v1161 = vunpack.c.h.b16 %v1114
    %v1162 = vunpack.c.l.b16 %v1115
    %v1163 = vunpack.c.h.b16 %v1115
    %v1164 = vpack.c.b16 %v1132, %v1132
    %v1165 = vpack.c.b16 %v1133, %v1133
    %v1166 = vpack.c.b16 %v1134, %v1134
    %v1167 = vpack.c.b16 %v1135, %v1135
    %v1168 = vpack.c.b16 %v1136, %v1136
    %v1169 = vpack.c.b16 %v1137, %v1137
    %v1170 = vpack.c.b16 %v1138, %v1138
    %v1171 = vpack.c.b16 %v1139, %v1139
    %v1172 = vpack.c.b16 %v1140, %v1140
    %v1173 = vpack.c.b16 %v1141, %v1141
    %v1174 = vpack.c.b16 %v1142, %v1142
    %v1175 = vpack.c.b16 %v1143, %v1143
    %v1176 = vpack.c.b16 %v1144, %v1144
    %v1177 = vpack.c.b16 %v1145, %v1145
    %v1178 = vpack.c.b16 %v1146, %v1146
    %v1179 = vpack.c.b16 %v1147, %v1147
    %v1180 = vpack.c.b16 %v1148, %v1148
    %v1181 = vpack.c.b16 %v1149, %v1149
    %v1182 = vpack.c.b16 %v1150, %v1150
    %v1183 = vpack.c.b16 %v1151, %v1151
    %v1184 = vpack.c.b16 %v1152, %v1152
    %v1185 = vpack.c.b16 %v1153, %v1153
    %v1186 = vpack.c.b16 %v1154, %v1154
    %v1187 = vpack.c.b16 %v1155, %v1155
    %v1188 = vpack.c.b16 %v1156, %v1156
    %v1189 = vpack.c.b16 %v1157, %v1157
    %v1190 = vpack.c.b16 %v1158, %v1158
    %v1191 = vpack.c.b16 %v1159, %v1159
    %v1192 = vpack.c.b16 %v1160, %v1160
    %v1193 = vpack.c.b16 %v1161, %v1161
    %v1194 = vpack.c.b16 %v1162, %v1162
    %v1195 = vpack.c.b16 %v1163, %v1163
    %1228 = vst [vmem:[%s4] sm:$0xf] %v1164
    %1229 = vst [vmem:[%s4 + $0x4] sm:$0xf] %v1165
    %1230 = vst [vmem:[%s4 + $0x8] sm:$0xf] %v1166
    %1231 = vst [vmem:[%s4 + $0xc] sm:$0xf] %v1167
    %1232 = vst [vmem:[%s4 + $0x10] sm:$0xf] %v1168
    %1233 = vst [vmem:[%s4 + $0x14] sm:$0xf] %v1169
    %1234 = vst [vmem:[%s4 + $0x18] sm:$0xf] %v1170
    %1235 = vst [vmem:[%s4 + $0x1c] sm:$0xf] %v1171
    %1236 = vst [vmem:[%s4 + $0x20] sm:$0xf] %v1172
    %1237 = vst [vmem:[%s4 + $0x24] sm:$0xf] %v1173
    %1238 = vst [vmem:[%s4 + $0x28] sm:$0xf] %v1174
    %1239 = vst [vmem:[%s4 + $0x2c] sm:$0xf] %v1175
    %1240 = vst [vmem:[%s4 + $0x30] sm:$0xf] %v1176
    %1241 = vst [vmem:[%s4 + $0x34] sm:$0xf] %v1177
    %1242 = vst [vmem:[%s4 + $0x38] sm:$0xf] %v1178
    %1243 = vst [vmem:[%s4 + $0x3c] sm:$0xf] %v1179
    %1244 = vst [vmem:[%s4 + $0x40] sm:$0xf] %v1180
    %1245 = vst [vmem:[%s4 + $0x44] sm:$0xf] %v1181
    %1246 = vst [vmem:[%s4 + $0x48] sm:$0xf] %v1182
    %1247 = vst [vmem:[%s4 + $0x4c] sm:$0xf] %v1183
    %1248 = vst [vmem:[%s4 + $0x50] sm:$0xf] %v1184
    %1249 = vst [vmem:[%s4 + $0x54] sm:$0xf] %v1185
    %1250 = vst [vmem:[%s4 + $0x58] sm:$0xf] %v1186
    %1251 = vst [vmem:[%s4 + $0x5c] sm:$0xf] %v1187
    %1252 = vst [vmem:[%s4 + $0x60] sm:$0xf] %v1188
    %1253 = vst [vmem:[%s4 + $0x64] sm:$0xf] %v1189
    %1254 = vst [vmem:[%s4 + $0x68] sm:$0xf] %v1190
    %1255 = vst [vmem:[%s4 + $0x6c] sm:$0xf] %v1191
    %1256 = vst [vmem:[%s4 + $0x70] sm:$0xf] %v1192
    %1257 = vst [vmem:[%s4 + $0x74] sm:$0xf] %v1193
    %1258 = vst [vmem:[%s4 + $0x78] sm:$0xf] %v1194
    %1259 = vst [vmem:[%s4 + $0x7c] sm:$0xf] %v1195
    %v1260 = vunpack.c.l.bf16 %v1100
    %v1261 = vunpack.c.h.bf16 %v1100
    %v1262 = vunpack.c.l.bf16 %v1101
    %v1263 = vunpack.c.h.bf16 %v1101
    %v1264 = vunpack.c.l.bf16 %v1102
    %v1265 = vunpack.c.h.bf16 %v1102
    %v1266 = vunpack.c.l.bf16 %v1103
    %v1267 = vunpack.c.h.bf16 %v1103
    %v1268 = vunpack.c.l.bf16 %v1104
    %v1269 = vunpack.c.h.bf16 %v1104
    %v1270 = vunpack.c.l.bf16 %v1105
    %v1271 = vunpack.c.h.bf16 %v1105
    %v1272 = vunpack.c.l.bf16 %v1106
    %v1273 = vunpack.c.h.bf16 %v1106
    %v1274 = vunpack.c.l.bf16 %v1107
    %v1275 = vunpack.c.h.bf16 %v1107
    %v1276 = vunpack.c.l.bf16 %v1108
    %v1277 = vunpack.c.h.bf16 %v1108
    %v1278 = vunpack.c.l.bf16 %v1109
    %v1279 = vunpack.c.h.bf16 %v1109
    %v1280 = vunpack.c.l.bf16 %v1110
    %v1281 = vunpack.c.h.bf16 %v1110
    %v1282 = vunpack.c.l.bf16 %v1111
    %v1283 = vunpack.c.h.bf16 %v1111
    %v1284 = vunpack.c.l.bf16 %v1112
    %v1285 = vunpack.c.h.bf16 %v1112
    %v1286 = vunpack.c.l.bf16 %v1113
    %v1287 = vunpack.c.h.bf16 %v1113
    %v1288 = vunpack.c.l.bf16 %v1114
    %v1289 = vunpack.c.h.bf16 %v1114
    %v1290 = vunpack.c.l.bf16 %v1115
    %v1291 = vunpack.c.h.bf16 %v1115
    %v1292 = vadd.f32 %v1260, %v1261
    %v1293 = vadd.f32 %v1292, %v1262
    %v1294 = vadd.f32 %v1293, %v1263
    %v1295 = vadd.f32 %v1294, %v1264
    %v1296 = vadd.f32 %v1295, %v1265
    %v1297 = vadd.f32 %v1296, %v1266
    %v1298 = vadd.f32 %v1297, %v1267
    %v1299 = vadd.f32 %v1298, %v1268
    %v1300 = vadd.f32 %v1299, %v1269
    %v1301 = vadd.f32 %v1300, %v1270
    %v1302 = vadd.f32 %v1301, %v1271
    %v1303 = vadd.f32 %v1302, %v1272
    %v1304 = vadd.f32 %v1303, %v1273
    %v1305 = vadd.f32 %v1304, %v1274
    %v1306 = vadd.f32 %v1305, %v1275
    %v1307 = vadd.f32 %v1306, %v1276
    %v1308 = vadd.f32 %v1307, %v1277
    %v1309 = vadd.f32 %v1308, %v1278
    %v1310 = vadd.f32 %v1309, %v1279
    %v1311 = vadd.f32 %v1310, %v1280
    %v1312 = vadd.f32 %v1311, %v1281
    %v1313 = vadd.f32 %v1312, %v1282
    %v1314 = vadd.f32 %v1313, %v1283
    %v1315 = vadd.f32 %v1314, %v1284
    %v1316 = vadd.f32 %v1315, %v1285
    %v1317 = vadd.f32 %v1316, %v1286
    %v1318 = vadd.f32 %v1317, %v1287
    %v1319 = vadd.f32 %v1318, %v1288
    %v1320 = vadd.f32 %v1319, %v1289
    %v1321 = vadd.f32 %v1320, %v1290
    %v1322 = vadd.f32 %v1321, %v1291
    %v1323 = vrot.slane %v1322, 4
    %v1324 = vadd.f32 %v1322, %v1323
    %v1325 = vrot.slane %v1324, 2
    %v1326 = vadd.f32 %v1324, %v1325
    %v1327 = vrot.slane %v1326, 1
    %v1328 = vadd.f32 %v1326, %v1327
    %1329 = vst [vmem:[%s5] sm:$0x1] %v1328
    %v1330 = vmul.f32 %v1260, %v1260
    %v1331 = vmul.f32 %v1261, %v1261
    %v1332 = vmul.f32 %v1262, %v1262
    %v1333 = vmul.f32 %v1263, %v1263
    %v1334 = vmul.f32 %v1264, %v1264
    %v1335 = vmul.f32 %v1265, %v1265
    %v1336 = vmul.f32 %v1266, %v1266
    %v1337 = vmul.f32 %v1267, %v1267
    %v1338 = vmul.f32 %v1268, %v1268
    %v1339 = vmul.f32 %v1269, %v1269
    %v1340 = vmul.f32 %v1270, %v1270
    %v1341 = vmul.f32 %v1271, %v1271
    %v1342 = vmul.f32 %v1272, %v1272
    %v1343 = vmul.f32 %v1273, %v1273
    %v1344 = vmul.f32 %v1274, %v1274
    %v1345 = vmul.f32 %v1275, %v1275
    %v1346 = vmul.f32 %v1276, %v1276
    %v1347 = vmul.f32 %v1277, %v1277
    %v1348 = vmul.f32 %v1278, %v1278
    %v1349 = vmul.f32 %v1279, %v1279
    %v1350 = vmul.f32 %v1280, %v1280
    %v1351 = vmul.f32 %v1281, %v1281
    %v1352 = vmul.f32 %v1282, %v1282
    %v1353 = vmul.f32 %v1283, %v1283
    %v1354 = vmul.f32 %v1284, %v1284
    %v1355 = vmul.f32 %v1285, %v1285
    %v1356 = vmul.f32 %v1286, %v1286
    %v1357 = vmul.f32 %v1287, %v1287
    %v1358 = vmul.f32 %v1288, %v1288
    %v1359 = vmul.f32 %v1289, %v1289
    %v1360 = vmul.f32 %v1290, %v1290
    %v1361 = vmul.f32 %v1291, %v1291
    %v1362 = vadd.f32 %v1330, %v1331
    %v1363 = vadd.f32 %v1362, %v1332
    %v1364 = vadd.f32 %v1363, %v1333
    %v1365 = vadd.f32 %v1364, %v1334
    %v1366 = vadd.f32 %v1365, %v1335
    %v1367 = vadd.f32 %v1366, %v1336
    %v1368 = vadd.f32 %v1367, %v1337
    %v1369 = vadd.f32 %v1368, %v1338
    %v1370 = vadd.f32 %v1369, %v1339
    %v1371 = vadd.f32 %v1370, %v1340
    %v1372 = vadd.f32 %v1371, %v1341
    %v1373 = vadd.f32 %v1372, %v1342
    %v1374 = vadd.f32 %v1373, %v1343
    %v1375 = vadd.f32 %v1374, %v1344
    %v1376 = vadd.f32 %v1375, %v1345
    %v1377 = vadd.f32 %v1376, %v1346
    %v1378 = vadd.f32 %v1377, %v1347
    %v1379 = vadd.f32 %v1378, %v1348
    %v1380 = vadd.f32 %v1379, %v1349
    %v1381 = vadd.f32 %v1380, %v1350
    %v1382 = vadd.f32 %v1381, %v1351
    %v1383 = vadd.f32 %v1382, %v1352
    %v1384 = vadd.f32 %v1383, %v1353
    %v1385 = vadd.f32 %v1384, %v1354
    %v1386 = vadd.f32 %v1385, %v1355
    %v1387 = vadd.f32 %v1386, %v1356
    %v1388 = vadd.f32 %v1387, %v1357
    %v1389 = vadd.f32 %v1388, %v1358
    %v1390 = vadd.f32 %v1389, %v1359
    %v1391 = vadd.f32 %v1390, %v1360
    %v1392 = vadd.f32 %v1391, %v1361
    %v1393 = vrot.slane %v1392, 4
    %v1394 = vadd.f32 %v1392, %v1393
    %v1395 = vrot.slane %v1394, 2
    %v1396 = vadd.f32 %v1394, %v1395
    %v1397 = vrot.slane %v1396, 1
    %v1398 = vadd.f32 %v1396, %v1397
    %1399 = vst [vmem:[%s6] sm:$0x1] %v1398
  $region25: #{gin_edge_aggregator.4} parent=0 // pred_fallthru
    _
  // Predicated region
  $region26: #{gin_edge_aggregator.4} parent=0 // pred_check
    _
  $region27: #{gin_edge_aggregator.4} parent=0 // pred_check_branch
    %1401 = sbr.rel (0) target = $region29
  $region28: #{gin_edge_aggregator.4} parent=0 // pred_region
    _
  $region29: #{gin_edge_aggregator.4} parent=0 // pred_fallthru
    _
  // Predicated region
  $region30: #{gin_edge_aggregator.4} parent=0 // pred_check
    _
  $region31: #{gin_edge_aggregator.4} parent=0 // pred_check_branch
    %1403 = sbr.rel (0) target = $region33
  $region32: #{gin_edge_aggregator.4} parent=0 // pred_region
    _
  $region33: #{gin_edge_aggregator.4} parent=0 // pred_fallthru
    _
  // Predicated region
  $region34: #{gin_edge_aggregator.4} parent=0 // pred_check
    _
  $region35: #{gin_edge_aggregator.4} parent=0 // pred_check_branch
    %1405 = sbr.rel (0) target = $region37
  $region36: #{gin_edge_aggregator.4} parent=0 // pred_region
    _
  $region37: #{gin_edge_aggregator.4} parent=0 // pred_fallthru
    _
  // Predicated region
  $region38: #{gin_edge_aggregator.4} parent=0 // pred_check
    _
  $region39: #{gin_edge_aggregator.4} parent=0 // pred_check_branch
    %1407 = sbr.rel (0) target = $region41
  $region40: #{gin_edge_aggregator.4} parent=0 // pred_region
    _
  $region41: #{gin_edge_aggregator.4} parent=0 // pred_fallthru
    _
  // Predicated region
  $region42: #{gin_edge_aggregator.4} parent=0 // pred_check
    _
  $region43: #{gin_edge_aggregator.4} parent=0 // pred_check_branch
    %1409 = sbr.rel (0) target = $region45
  $region44: #{gin_edge_aggregator.4} parent=0 // pred_region
    _
  $region45: #{gin_edge_aggregator.4} parent=0 // pred_fallthru
    _
  // Predicated region
  $region46: #{gin_edge_aggregator.4} parent=0 // pred_check
    _
  $region47: #{gin_edge_aggregator.4} parent=0 // pred_check_branch
    %1411 = sbr.rel (0) target = $region49
  $region48: #{gin_edge_aggregator.4} parent=0 // pred_region
    _
  $region49: #{gin_edge_aggregator.4} parent=0 // pred_fallthru
    _

</llo_original>
